<compile_context>
chip_gen: v5e
topology: v5e:2x2
jax: 0.10.0
libtpu: 0.0.40
codegen_flags: <defaults>
</compile_context>

<pallas_src>
import functools
import math

import jax
import jax.numpy as jnp
from jax.experimental import pallas as pl
from jax.experimental.pallas import tpu as pltpu

BN_EPS = 1e-5
LANE = 128


def _bn_train(y, gamma=None, beta=None):
    """BatchNorm1d forward in training mode (batch stats, biased var), f32."""
    mu = jnp.mean(y, axis=0, keepdims=True)
    var = jnp.mean((y - mu) ** 2, axis=0, keepdims=True)
    yhat = (y - mu) * jax.lax.rsqrt(var + BN_EPS)
    if gamma is not None:
        yhat = yhat * gamma + beta
    return yhat


def _simsiam_kernel(
    x_ref,                      # (B, C, tS)  bf16, spatial on the lane axis
    wc_ref,                     # (C, Fp)     f32, zero-padded 1x1-conv weight
    w1_ref, g1_ref, b1_ref,     # proj 1: (Fp,512) bf16, (1,512) f32 x2
    w2_ref, g2_ref, b2_ref,     # proj 2: (512,512) bf16, (1,512) f32 x2
    w3_ref,                     # proj 3: (512,128) bf16  (BN affine=False)
    w4_ref, g4_ref, b4_ref,     # pred 1: (128,Np) bf16, (1,Np) f32 x2
    w5_ref, bias5_ref,          # pred 2: (Np,128) bf16, (1,128) f32
    f_ref, z_ref, p_ref,        # outputs (B,Fp), (B,128), (B,128) f32
    acc_ref,                    # scratch (B,Fp) f32: running pooled sum
    *, inv_s,
):
    step = pl.program_id(0)
    B, _, tS = x_ref.shape

    @pl.when(step == 0)
    def _():
        acc_ref[...] = jnp.zeros_like(acc_ref)

    # ---- backbone: 1x1 conv + ReLU + global-avg-pool over one spatial tile --
    # Per image: (tS, C) @ (C, Fp) on the MXU, ReLU, then a sublane reduction
    # directly to a lane-dense (1, Fp) pooled row -- no relayout needed before
    # accumulating into acc_ref.  B is tiny and static, so the Python loop is
    # fully unrolled at trace time and the transient footprint stays at one
    # (tS, Fp) f32 tile.  (Conv compute is negligible at K=C; f32 keeps
    # lowering simple -- the bf16 win, halved x/weight HBM traffic, is taken.)
    wc = wc_ref[...]                                                  # (C, Fp)
    rows = []
    for b in range(B):
        xb = x_ref[b].astype(jnp.float32)                             # (C, tS)
        hb = jnp.dot(xb.T, wc, preferred_element_type=jnp.float32)    # (tS, Fp)
        hb = jnp.maximum(hb, 0.0)
        rows.append(jnp.sum(hb, axis=0, keepdims=True))               # (1, Fp)
    acc_ref[...] += jnp.concatenate(rows, axis=0)                     # (B, Fp)

    # ---- heads: run once on the last tile (full-batch BN statistics) -------
    @pl.when(step == pl.num_programs(0) - 1)
    def _():
        f = acc_ref[...] * inv_s                # global average pool, (B, Fp)
        f_ref[...] = f

        # projection head
        y1 = jnp.dot(f.astype(jnp.bfloat16), w1_ref[...],
                     preferred_element_type=jnp.float32)
        y1 = jnp.maximum(_bn_train(y1, g1_ref[...], b1_ref[...]), 0.0)

        y2 = jnp.dot(y1.astype(jnp.bfloat16), w2_ref[...],
                     preferred_element_type=jnp.float32)
        y2 = jnp.maximum(_bn_train(y2, g2_ref[...], b2_ref[...]), 0.0)

        z = _bn_train(jnp.dot(y2.astype(jnp.bfloat16), w3_ref[...],
                              preferred_element_type=jnp.float32))
        z_ref[...] = z

        # prediction head (hidden 64 zero-padded to 128 lanes; pads stay 0)
        q1 = jnp.dot(z.astype(jnp.bfloat16), w4_ref[...],
                     preferred_element_type=jnp.float32)
        q1 = jnp.maximum(_bn_train(q1, g4_ref[...], b4_ref[...]), 0.0)

        p = jnp.dot(q1.astype(jnp.bfloat16), w5_ref[...],
                    preferred_element_type=jnp.float32) + bias5_ref[...]
        p_ref[...] = p


def _pad_axis(a, axis, new_size, value=0.0):
    pad = [(0, 0)] * a.ndim
    pad[axis] = (0, new_size - a.shape[axis])
    return jnp.pad(a, pad, constant_values=value)


def _prepare_kernel_params(params, Fp, Np):
    """Zero-pad feature dims to 128-lane multiples; big weights -> bf16."""
    f32 = lambda a: a.astype(jnp.float32)
    bf16 = lambda a: a.astype(jnp.bfloat16)
    return dict(
        wc=f32(_pad_axis(params["wc"], 1, Fp)),       # (C, Fp), extra cols = 0
        w1=bf16(_pad_axis(params["w1"], 0, Fp)),      # (Fp, 512), extra rows = 0
        g1=f32(params["g1"]), b1=f32(params["b1"]),
        w2=bf16(params["w2"]), g2=f32(params["g2"]), b2=f32(params["b2"]),
        w3=bf16(params["w3"]),
        w4=bf16(_pad_axis(params["w4"], 1, Np)),      # (128, Np)
        g4=f32(_pad_axis(params["g4"], 1, Np, value=1.0)),
        b4=f32(_pad_axis(params["b4"], 1, Np)),
        w5=bf16(_pad_axis(params["w5"], 0, Np)),      # (Np, 128)
        bias5=f32(params["bias5"]),
    )


def _pick_spatial_tile(s, max_tile):
    """Largest 128-multiple divisor of s that is <= max_tile, else full s.

    The last block dim must be a multiple of 128 or equal the full extent.
    """
    if s <= max_tile:
        return s
    t = (max_tile // LANE) * LANE
    while t >= LANE:
        if s % t == 0:
            return t
        t -= LANE
    return s


def simsiam_forward(x_nchw, params, *, spatial_tile=512):
    """x_nchw: (B, C, H, W) float32. Returns (f, z, p)."""
    B, C, H, W = x_nchw.shape
    S = H * W
    F = params["wc"].shape[1]
    Fp = max(LANE, ((F + LANE - 1) // LANE) * LANE)
    Np = max(LANE, ((params["w4"].shape[1] + LANE - 1) // LANE) * LANE)

    # NCHW -> (B, C, H*W): a pure reshape; the spatial axis becomes the dense
    # 128-lane minor dim of every x tile. Cast to bf16 to halve x HBM traffic.
    x = x_nchw.reshape(B, C, S).astype(jnp.bfloat16)

    tS = _pick_spatial_tile(S, spatial_tile)
    grid = (S // tS,)

    kp = _prepare_kernel_params(params, Fp, Np)
    ins = [x,
           kp["wc"],
           kp["w1"], kp["g1"], kp["b1"],
           kp["w2"], kp["g2"], kp["b2"],
           kp["w3"],
           kp["w4"], kp["g4"], kp["b4"],
           kp["w5"], kp["bias5"]]

    def whole(a):
        n = a.ndim
        return pl.BlockSpec(a.shape, lambda s, _n=n: (0,) * _n)  # DMA'd once

    in_specs = ([pl.BlockSpec((B, C, tS), lambda s: (0, 0, s))]
                + [whole(a) for a in ins[1:]])
    out_specs = (pl.BlockSpec((B, Fp), lambda s: (0, 0)),
                 pl.BlockSpec((B, 128), lambda s: (0, 0)),
                 pl.BlockSpec((B, 128), lambda s: (0, 0)))
    out_shape = (jax.ShapeDtypeStruct((B, Fp), jnp.float32),   # f (padded)
                 jax.ShapeDtypeStruct((B, 128), jnp.float32),  # z
                 jax.ShapeDtypeStruct((B, 128), jnp.float32))  # p

    conv_flops = 2 * B * S * C * Fp
    head_flops = 2 * B * (Fp * 512 + 512 * 512 + 512 * 128 + 128 * Np + Np * 128)
    bytes_in = sum(math.prod(a.shape) * a.dtype.itemsize for a in ins)
    bytes_out = (B * Fp + 2 * B * 128) * 4
    cost = pl.CostEstimate(flops=conv_flops + head_flops,
                           transcendentals=512 + 512 + 128 + Np,
                           bytes_accessed=bytes_in + bytes_out)

    f_pad, z, p = pl.pallas_call(
        functools.partial(_simsiam_kernel, inv_s=1.0 / float(S)),
        grid=grid,
        in_specs=in_specs,
        out_specs=out_specs,
        out_shape=out_shape,
        scratch_shapes=[pltpu.VMEM((B, Fp), jnp.float32)],
        compiler_params=pltpu.CompilerParams(
            dimension_semantics=("arbitrary",),        # pooled-sum reduction axis
            vmem_limit_bytes=32 * 1024 * 1024),
        cost_estimate=cost,
    )(*ins)

    # z is "detached" in PyTorch — forward values are identical.
    return f_pad[:, :F], z, p


def init_params(key, c_in, out_feature):
    """Deterministic synthetic parameters in their true (un-padded) shapes."""
    ks = jax.random.split(key, 8)

    def lin(k, fan_in, fan_out):
        return (jax.random.normal(k, (fan_in, fan_out), jnp.float32)
                / jnp.sqrt(jnp.float32(fan_in)))

    F = out_feature
    return {
        "wc": lin(ks[0], c_in, F),                    # backbone 1x1 conv
        "w1": lin(ks[1], F, 512),
        "g1": jnp.ones((1, 512), jnp.float32),
        "b1": jnp.zeros((1, 512), jnp.float32),
        "w2": lin(ks[2], 512, 512),
        "g2": jnp.ones((1, 512), jnp.float32),
        "b2": jnp.zeros((1, 512), jnp.float32),
        "w3": lin(ks[3], 512, 128),
        "w4": lin(ks[4], 128, 64),
        "g4": jnp.ones((1, 64), jnp.float32),
        "b4": jnp.zeros((1, 64), jnp.float32),
        "w5": lin(ks[5], 64, 128),
        "bias5": jax.random.normal(ks[6], (1, 128), jnp.float32) * 0.01,
    }


if __name__ == "__main__":
    key = jax.random.PRNGKey(0)
    k_x, k_p = jax.random.split(key)

    B, C, H, W = 2, 4, 16, 16
    OUT_FEATURE = 32  # backbone feature dim (small synthetic choice)

    x = jax.random.normal(k_x, (B, C, H, W), jnp.float32)
    params = init_params(k_p, C, OUT_FEATURE)

    # spatial_tile=128 -> grid of 2 spatial tiles for this shape, exercising
    # the pipelined pooled-sum accumulation path (larger default is for real
    # image sizes).
    fwd = jax.jit(functools.partial(simsiam_forward, spatial_tile=128))
    f, z, p = fwd(x, params)
    jax.block_until_ready((f, z, p))

    assert f.shape == (B, OUT_FEATURE)
    assert z.shape == (B, 128)
    assert p.shape == (B, 128)
    assert bool(jnp.all(jnp.isfinite(f))) and bool(jnp.all(jnp.isfinite(z))) \
        and bool(jnp.all(jnp.isfinite(p)))

    print("KERNEL_OK")
</pallas_src>

<mosaic_0001>
module attributes {stable_mosaic.version = 11 : i64} {
  func.func @_simsiam_kernel(%arg0: i32, %arg1: memref<2x4x128xbf16, #tpu.memory_space<vmem>>, %arg2: memref<4x128xf32, #tpu.memory_space<vmem>>, %arg3: memref<128x512xbf16, #tpu.memory_space<vmem>>, %arg4: memref<1x512xf32, #tpu.memory_space<vmem>>, %arg5: memref<1x512xf32, #tpu.memory_space<vmem>>, %arg6: memref<512x512xbf16, #tpu.memory_space<vmem>>, %arg7: memref<1x512xf32, #tpu.memory_space<vmem>>, %arg8: memref<1x512xf32, #tpu.memory_space<vmem>>, %arg9: memref<512x128xbf16, #tpu.memory_space<vmem>>, %arg10: memref<128x128xbf16, #tpu.memory_space<vmem>>, %arg11: memref<1x128xf32, #tpu.memory_space<vmem>>, %arg12: memref<1x128xf32, #tpu.memory_space<vmem>>, %arg13: memref<128x128xbf16, #tpu.memory_space<vmem>>, %arg14: memref<1x128xf32, #tpu.memory_space<vmem>>, %arg15: memref<2x128xf32, #tpu.memory_space<vmem>>, %arg16: memref<2x128xf32, #tpu.memory_space<vmem>>, %arg17: memref<2x128xf32, #tpu.memory_space<vmem>>, %arg18: memref<2x128xf32, #tpu.memory_space<vmem>>) attributes {dimension_semantics = [#tpu.dimension_semantics<arbitrary>], iteration_bounds = array<i64: 2>, scalar_prefetch = 0 : i64, scratch_operands = 1 : i64, tpu.core_type = #tpu.core_type<tc>, window_params = [{transform_indices = @transform_0, window_bounds = array<i64: 2, 4, 128>}, {pipeline_mode = #tpu.pipeline_mode<synchronous>, transform_indices = @transform_1, window_bounds = array<i64: 4, 128>}, {pipeline_mode = #tpu.pipeline_mode<synchronous>, transform_indices = @transform_2, window_bounds = array<i64: 128, 512>}, {pipeline_mode = #tpu.pipeline_mode<synchronous>, transform_indices = @transform_3, window_bounds = array<i64: 1, 512>}, {pipeline_mode = #tpu.pipeline_mode<synchronous>, transform_indices = @transform_4, window_bounds = array<i64: 1, 512>}, {pipeline_mode = #tpu.pipeline_mode<synchronous>, transform_indices = @transform_5, window_bounds = array<i64: 512, 512>}, {pipeline_mode = #tpu.pipeline_mode<synchronous>, transform_indices = @transform_6, window_bounds = array<i64: 1, 512>}, {pipeline_mode = #tpu.pipeline_mode<synchronous>, transform_indices = @transform_7, window_bounds = array<i64: 1, 512>}, {pipeline_mode = #tpu.pipeline_mode<synchronous>, transform_indices = @transform_8, window_bounds = array<i64: 512, 128>}, {pipeline_mode = #tpu.pipeline_mode<synchronous>, transform_indices = @transform_9, window_bounds = array<i64: 128, 128>}, {pipeline_mode = #tpu.pipeline_mode<synchronous>, transform_indices = @transform_10, window_bounds = array<i64: 1, 128>}, {pipeline_mode = #tpu.pipeline_mode<synchronous>, transform_indices = @transform_11, window_bounds = array<i64: 1, 128>}, {pipeline_mode = #tpu.pipeline_mode<synchronous>, transform_indices = @transform_12, window_bounds = array<i64: 128, 128>}, {pipeline_mode = #tpu.pipeline_mode<synchronous>, transform_indices = @transform_13, window_bounds = array<i64: 1, 128>}, {pipeline_mode = #tpu.pipeline_mode<synchronous>, transform_indices = @transform_14, window_bounds = array<i64: 2, 128>}, {pipeline_mode = #tpu.pipeline_mode<synchronous>, transform_indices = @transform_15, window_bounds = array<i64: 2, 128>}, {pipeline_mode = #tpu.pipeline_mode<synchronous>, transform_indices = @transform_16, window_bounds = array<i64: 2, 128>}]} {
    %c0_i32 = arith.constant 0 : i32
    %0 = arith.cmpi eq, %arg0, %c0_i32 : i32
    %1 = arith.extui %0 : i1 to i32
    %c0_i32_0 = arith.constant 0 : i32
    %2 = arith.cmpi ne, %1, %c0_i32_0 : i32
    scf.if %2 {
      %cst_17 = arith.constant 0.000000e+00 : f32
      %29 = vector.broadcast %cst_17 : f32 to vector<2x128xf32>
      %c0_18 = arith.constant 0 : index
      %c0_19 = arith.constant 0 : index
      %30 = vector.load %arg18[%c0_18, %c0_19] : memref<2x128xf32, #tpu.memory_space<vmem>>, vector<2x128xf32>
      tpu.vector_store %arg18[%c0_18, %c0_19], %29 {strides = array<i32>} : memref<2x128xf32, #tpu.memory_space<vmem>>, vector<2x128xf32>,
    } else {
    }
    %c0 = arith.constant 0 : index
    %c0_1 = arith.constant 0 : index
    %3 = vector.load %arg2[%c0, %c0_1] : memref<4x128xf32, #tpu.memory_space<vmem>>, vector<4x128xf32>
    %c0_2 = arith.constant 0 : index
    %c0_3 = arith.constant 0 : index
    %c0_4 = arith.constant 0 : index
    %4 = vector.load %arg1[%c0_2, %c0_3, %c0_4] : memref<2x4x128xbf16, #tpu.memory_space<vmem>>, vector<1x4x128xbf16>
    %5 = vector.shape_cast %4 : vector<1x4x128xbf16> to vector<4x128xbf16>
    %6 = arith.extf %5 : vector<4x128xbf16> to vector<4x128xf32>
    %7 = tpu.transpose %6, [1, 0] : vector<4x128xf32> -> vector<128x4xf32>
    %cst = arith.constant dense<0.000000e+00> : vector<128x128xf32>
    %8 = tpu.matmul %7, %3, %cst {dimension_numbers = #tpu.dot_dimension_numbers<[1], [0], [0], [1], [0, 0, 1, 1], [], []>} : vector<128x4xf32>, vector<4x128xf32>, vector<128x128xf32> -> vector<128x128xf32>
    %cst_5 = arith.constant 0.000000e+00 : f32
    %9 = vector.broadcast %cst_5 : f32 to vector<128x128xf32>
    %10 = arith.maximumf %8, %9 : vector<128x128xf32>
    %cst_6 = arith.constant dense<0.000000e+00> : vector<128xf32>
    %11 = vector.multi_reduction <add>, %10, %cst_6 [0] : vector<128x128xf32> to vector<128xf32>
    %12 = vector.shape_cast %11 : vector<128xf32> to vector<1x128xf32>
    %c1 = arith.constant 1 : index
    %c0_7 = arith.constant 0 : index
    %c0_8 = arith.constant 0 : index
    %13 = vector.load %arg1[%c1, %c0_7, %c0_8] : memref<2x4x128xbf16, #tpu.memory_space<vmem>>, vector<1x4x128xbf16>
    %14 = vector.shape_cast %13 : vector<1x4x128xbf16> to vector<4x128xbf16>
    %15 = arith.extf %14 : vector<4x128xbf16> to vector<4x128xf32>
    %16 = tpu.transpose %15, [1, 0] : vector<4x128xf32> -> vector<128x4xf32>
    %cst_9 = arith.constant dense<0.000000e+00> : vector<128x128xf32>
    %17 = tpu.matmul %16, %3, %cst_9 {dimension_numbers = #tpu.dot_dimension_numbers<[1], [0], [0], [1], [0, 0, 1, 1], [], []>} : vector<128x4xf32>, vector<4x128xf32>, vector<128x128xf32> -> vector<128x128xf32>
    %cst_10 = arith.constant 0.000000e+00 : f32
    %18 = vector.broadcast %cst_10 : f32 to vector<128x128xf32>
    %19 = arith.maximumf %17, %18 : vector<128x128xf32>
    %cst_11 = arith.constant dense<0.000000e+00> : vector<128xf32>
    %20 = vector.multi_reduction <add>, %19, %cst_11 [0] : vector<128x128xf32> to vector<128xf32>
    %21 = vector.shape_cast %20 : vector<128xf32> to vector<1x128xf32>
    %c0_12 = arith.constant 0 : index
    %c0_13 = arith.constant 0 : index
    %22 = vector.load %arg18[%c0_12, %c0_13] : memref<2x128xf32, #tpu.memory_space<vmem>>, vector<2x128xf32>
    %23 = tpu.concatenate %12, %21 in 0 : vector<1x128xf32>, vector<1x128xf32> -> vector<2x128xf32>
    %24 = arith.addf %22, %23 : vector<2x128xf32>
    %c0_14 = arith.constant 0 : index
    %c0_15 = arith.constant 0 : index
    %25 = vector.load %arg18[%c0_14, %c0_15] : memref<2x128xf32, #tpu.memory_space<vmem>>, vector<2x128xf32>
    tpu.vector_store %arg18[%c0_14, %c0_15], %24 {strides = array<i32>} : memref<2x128xf32, #tpu.memory_space<vmem>>, vector<2x128xf32>,
    %c1_i32 = arith.constant 1 : i32
    %26 = arith.cmpi eq, %arg0, %c1_i32 : i32
    %27 = arith.extui %26 : i1 to i32
    %c0_i32_16 = arith.constant 0 : i32
    %28 = arith.cmpi ne, %27, %c0_i32_16 : i32
    scf.if %28 {
      %c0_17 = arith.constant 0 : index
      %c0_18 = arith.constant 0 : index
      %29 = vector.load %arg18[%c0_17, %c0_18] : memref<2x128xf32, #tpu.memory_space<vmem>>, vector<2x128xf32>
      %cst_19 = arith.constant 3.906250e-03 : f32
      %30 = vector.broadcast %cst_19 : f32 to vector<2x128xf32>
      %31 = arith.mulf %29, %30 : vector<2x128xf32>
      %c0_20 = arith.constant 0 : index
      %c0_21 = arith.constant 0 : index
      %32 = vector.load %arg15[%c0_20, %c0_21] : memref<2x128xf32, #tpu.memory_space<vmem>>, vector<2x128xf32>
      tpu.vector_store %arg15[%c0_20, %c0_21], %31 {strides = array<i32>} : memref<2x128xf32, #tpu.memory_space<vmem>>, vector<2x128xf32>,
      %33 = arith.truncf %31 : vector<2x128xf32> to vector<2x128xbf16>
      %c0_22 = arith.constant 0 : index
      %c0_23 = arith.constant 0 : index
      %34 = vector.load %arg3[%c0_22, %c0_23] : memref<128x512xbf16, #tpu.memory_space<vmem>>, vector<128x512xbf16>
      %cst_24 = arith.constant dense<0.000000e+00> : vector<2x512xf32>
      %35 = tpu.matmul %33, %34, %cst_24 {dimension_numbers = #tpu.dot_dimension_numbers<[1], [0], [0], [1], [0, 0, 1, 1], [], []>} : vector<2x128xbf16>, vector<128x512xbf16>, vector<2x512xf32> -> vector<2x512xf32>
      %c0_25 = arith.constant 0 : index
      %c0_26 = arith.constant 0 : index
      %36 = vector.load %arg4[%c0_25, %c0_26] : memref<1x512xf32, #tpu.memory_space<vmem>>, vector<1x512xf32>
      %c0_27 = arith.constant 0 : index
      %c0_28 = arith.constant 0 : index
      %37 = vector.load %arg5[%c0_27, %c0_28] : memref<1x512xf32, #tpu.memory_space<vmem>>, vector<1x512xf32>
      %cst_29 = arith.constant dense<0.000000e+00> : vector<512xf32>
      %38 = vector.multi_reduction <add>, %35, %cst_29 [0] : vector<2x512xf32> to vector<512xf32>
      %39 = vector.shape_cast %38 : vector<512xf32> to vector<1x512xf32>
      %cst_30 = arith.constant 2.000000e+00 : f32
      %40 = vector.broadcast %cst_30 : f32 to vector<1x512xf32>
      %41 = arith.divf %39, %40 : vector<1x512xf32>
      %42 = vector.broadcast %41 : vector<1x512xf32> to vector<2x512xf32>
      %43 = arith.subf %35, %42 : vector<2x512xf32>
      %44 = arith.mulf %43, %43 : vector<2x512xf32>
      %cst_31 = arith.constant dense<0.000000e+00> : vector<512xf32>
      %45 = vector.multi_reduction <add>, %44, %cst_31 [0] : vector<2x512xf32> to vector<512xf32>
      %46 = vector.shape_cast %45 : vector<512xf32> to vector<1x512xf32>
      %cst_32 = arith.constant 2.000000e+00 : f32
      %47 = vector.broadcast %cst_32 : f32 to vector<1x512xf32>
      %48 = arith.divf %46, %47 : vector<1x512xf32>
      %49 = vector.broadcast %41 : vector<1x512xf32> to vector<2x512xf32>
      %50 = arith.subf %35, %49 : vector<2x512xf32>
      %cst_33 = arith.constant 9.99999974E-6 : f32
      %51 = vector.broadcast %cst_33 : f32 to vector<1x512xf32>
      %52 = arith.addf %48, %51 : vector<1x512xf32>
      %53 = math.rsqrt %52 : vector<1x512xf32>
      %54 = vector.broadcast %53 : vector<1x512xf32> to vector<2x512xf32>
      %55 = arith.mulf %50, %54 : vector<2x512xf32>
      %56 = vector.broadcast %36 : vector<1x512xf32> to vector<2x512xf32>
      %57 = arith.mulf %55, %56 : vector<2x512xf32>
      %58 = vector.broadcast %37 : vector<1x512xf32> to vector<2x512xf32>
      %59 = arith.addf %57, %58 : vector<2x512xf32>
      %cst_34 = arith.constant 0.000000e+00 : f32
      %60 = vector.broadcast %cst_34 : f32 to vector<2x512xf32>
      %61 = arith.maximumf %59, %60 : vector<2x512xf32>
      %62 = arith.truncf %61 : vector<2x512xf32> to vector<2x512xbf16>
      %c0_35 = arith.constant 0 : index
      %c0_36 = arith.constant 0 : index
      %63 = vector.load %arg6[%c0_35, %c0_36] : memref<512x512xbf16, #tpu.memory_space<vmem>>, vector<512x512xbf16>
      %cst_37 = arith.constant dense<0.000000e+00> : vector<2x512xf32>
      %64 = tpu.matmul %62, %63, %cst_37 {dimension_numbers = #tpu.dot_dimension_numbers<[1], [0], [0], [1], [0, 0, 1, 1], [], []>} : vector<2x512xbf16>, vector<512x512xbf16>, vector<2x512xf32> -> vector<2x512xf32>
      %c0_38 = arith.constant 0 : index
      %c0_39 = arith.constant 0 : index
      %65 = vector.load %arg7[%c0_38, %c0_39] : memref<1x512xf32, #tpu.memory_space<vmem>>, vector<1x512xf32>
      %c0_40 = arith.constant 0 : index
      %c0_41 = arith.constant 0 : index
      %66 = vector.load %arg8[%c0_40, %c0_41] : memref<1x512xf32, #tpu.memory_space<vmem>>, vector<1x512xf32>
      %cst_42 = arith.constant dense<0.000000e+00> : vector<512xf32>
      %67 = vector.multi_reduction <add>, %64, %cst_42 [0] : vector<2x512xf32> to vector<512xf32>
      %68 = vector.shape_cast %67 : vector<512xf32> to vector<1x512xf32>
      %cst_43 = arith.constant 2.000000e+00 : f32
      %69 = vector.broadcast %cst_43 : f32 to vector<1x512xf32>
      %70 = arith.divf %68, %69 : vector<1x512xf32>
      %71 = vector.broadcast %70 : vector<1x512xf32> to vector<2x512xf32>
      %72 = arith.subf %64, %71 : vector<2x512xf32>
      %73 = arith.mulf %72, %72 : vector<2x512xf32>
      %cst_44 = arith.constant dense<0.000000e+00> : vector<512xf32>
      %74 = vector.multi_reduction <add>, %73, %cst_44 [0] : vector<2x512xf32> to vector<512xf32>
      %75 = vector.shape_cast %74 : vector<512xf32> to vector<1x512xf32>
      %cst_45 = arith.constant 2.000000e+00 : f32
      %76 = vector.broadcast %cst_45 : f32 to vector<1x512xf32>
      %77 = arith.divf %75, %76 : vector<1x512xf32>
      %78 = vector.broadcast %70 : vector<1x512xf32> to vector<2x512xf32>
      %79 = arith.subf %64, %78 : vector<2x512xf32>
      %cst_46 = arith.constant 9.99999974E-6 : f32
      %80 = vector.broadcast %cst_46 : f32 to vector<1x512xf32>
      %81 = arith.addf %77, %80 : vector<1x512xf32>
      %82 = math.rsqrt %81 : vector<1x512xf32>
      %83 = vector.broadcast %82 : vector<1x512xf32> to vector<2x512xf32>
      %84 = arith.mulf %79, %83 : vector<2x512xf32>
      %85 = vector.broadcast %65 : vector<1x512xf32> to vector<2x512xf32>
      %86 = arith.mulf %84, %85 : vector<2x512xf32>
      %87 = vector.broadcast %66 : vector<1x512xf32> to vector<2x512xf32>
      %88 = arith.addf %86, %87 : vector<2x512xf32>
      %cst_47 = arith.constant 0.000000e+00 : f32
      %89 = vector.broadcast %cst_47 : f32 to vector<2x512xf32>
      %90 = arith.maximumf %88, %89 : vector<2x512xf32>
      %91 = arith.truncf %90 : vector<2x512xf32> to vector<2x512xbf16>
      %c0_48 = arith.constant 0 : index
      %c0_49 = arith.constant 0 : index
      %92 = vector.load %arg9[%c0_48, %c0_49] : memref<512x128xbf16, #tpu.memory_space<vmem>>, vector<512x128xbf16>
      %cst_50 = arith.constant dense<0.000000e+00> : vector<2x128xf32>
      %93 = tpu.matmul %91, %92, %cst_50 {dimension_numbers = #tpu.dot_dimension_numbers<[1], [0], [0], [1], [0, 0, 1, 1], [], []>} : vector<2x512xbf16>, vector<512x128xbf16>, vector<2x128xf32> -> vector<2x128xf32>
      %cst_51 = arith.constant dense<0.000000e+00> : vector<128xf32>
      %94 = vector.multi_reduction <add>, %93, %cst_51 [0] : vector<2x128xf32> to vector<128xf32>
      %95 = vector.shape_cast %94 : vector<128xf32> to vector<1x128xf32>
      %cst_52 = arith.constant 2.000000e+00 : f32
      %96 = vector.broadcast %cst_52 : f32 to vector<1x128xf32>
      %97 = arith.divf %95, %96 : vector<1x128xf32>
      %98 = vector.broadcast %97 : vector<1x128xf32> to vector<2x128xf32>
      %99 = arith.subf %93, %98 : vector<2x128xf32>
      %100 = arith.mulf %99, %99 : vector<2x128xf32>
      %cst_53 = arith.constant dense<0.000000e+00> : vector<128xf32>
      %101 = vector.multi_reduction <add>, %100, %cst_53 [0] : vector<2x128xf32> to vector<128xf32>
      %102 = vector.shape_cast %101 : vector<128xf32> to vector<1x128xf32>
      %cst_54 = arith.constant 2.000000e+00 : f32
      %103 = vector.broadcast %cst_54 : f32 to vector<1x128xf32>
      %104 = arith.divf %102, %103 : vector<1x128xf32>
      %105 = vector.broadcast %97 : vector<1x128xf32> to vector<2x128xf32>
      %106 = arith.subf %93, %105 : vector<2x128xf32>
      %cst_55 = arith.constant 9.99999974E-6 : f32
      %107 = vector.broadcast %cst_55 : f32 to vector<1x128xf32>
      %108 = arith.addf %104, %107 : vector<1x128xf32>
      %109 = math.rsqrt %108 : vector<1x128xf32>
      %110 = vector.broadcast %109 : vector<1x128xf32> to vector<2x128xf32>
      %111 = arith.mulf %106, %110 : vector<2x128xf32>
      %c0_56 = arith.constant 0 : index
      %c0_57 = arith.constant 0 : index
      %112 = vector.load %arg16[%c0_56, %c0_57] : memref<2x128xf32, #tpu.memory_space<vmem>>, vector<2x128xf32>
      tpu.vector_store %arg16[%c0_56, %c0_57], %111 {strides = array<i32>} : memref<2x128xf32, #tpu.memory_space<vmem>>, vector<2x128xf32>,
      %113 = arith.truncf %111 : vector<2x128xf32> to vector<2x128xbf16>
      %c0_58 = arith.constant 0 : index
      %c0_59 = arith.constant 0 : index
      %114 = vector.load %arg10[%c0_58, %c0_59] : memref<128x128xbf16, #tpu.memory_space<vmem>>, vector<128x128xbf16>
      %cst_60 = arith.constant dense<0.000000e+00> : vector<2x128xf32>
      %115 = tpu.matmul %113, %114, %cst_60 {dimension_numbers = #tpu.dot_dimension_numbers<[1], [0], [0], [1], [0, 0, 1, 1], [], []>} : vector<2x128xbf16>, vector<128x128xbf16>, vector<2x128xf32> -> vector<2x128xf32>
      %c0_61 = arith.constant 0 : index
      %c0_62 = arith.constant 0 : index
      %116 = vector.load %arg11[%c0_61, %c0_62] : memref<1x128xf32, #tpu.memory_space<vmem>>, vector<1x128xf32>
      %c0_63 = arith.constant 0 : index
      %c0_64 = arith.constant 0 : index
      %117 = vector.load %arg12[%c0_63, %c0_64] : memref<1x128xf32, #tpu.memory_space<vmem>>, vector<1x128xf32>
      %cst_65 = arith.constant dense<0.000000e+00> : vector<128xf32>
      %118 = vector.multi_reduction <add>, %115, %cst_65 [0] : vector<2x128xf32> to vector<128xf32>
      %119 = vector.shape_cast %118 : vector<128xf32> to vector<1x128xf32>
      %cst_66 = arith.constant 2.000000e+00 : f32
      %120 = vector.broadcast %cst_66 : f32 to vector<1x128xf32>
      %121 = arith.divf %119, %120 : vector<1x128xf32>
      %122 = vector.broadcast %121 : vector<1x128xf32> to vector<2x128xf32>
      %123 = arith.subf %115, %122 : vector<2x128xf32>
      %124 = arith.mulf %123, %123 : vector<2x128xf32>
      %cst_67 = arith.constant dense<0.000000e+00> : vector<128xf32>
      %125 = vector.multi_reduction <add>, %124, %cst_67 [0] : vector<2x128xf32> to vector<128xf32>
      %126 = vector.shape_cast %125 : vector<128xf32> to vector<1x128xf32>
      %cst_68 = arith.constant 2.000000e+00 : f32
      %127 = vector.broadcast %cst_68 : f32 to vector<1x128xf32>
      %128 = arith.divf %126, %127 : vector<1x128xf32>
      %129 = vector.broadcast %121 : vector<1x128xf32> to vector<2x128xf32>
      %130 = arith.subf %115, %129 : vector<2x128xf32>
      %cst_69 = arith.constant 9.99999974E-6 : f32
      %131 = vector.broadcast %cst_69 : f32 to vector<1x128xf32>
      %132 = arith.addf %128, %131 : vector<1x128xf32>
      %133 = math.rsqrt %132 : vector<1x128xf32>
      %134 = vector.broadcast %133 : vector<1x128xf32> to vector<2x128xf32>
      %135 = arith.mulf %130, %134 : vector<2x128xf32>
      %136 = vector.broadcast %116 : vector<1x128xf32> to vector<2x128xf32>
      %137 = arith.mulf %135, %136 : vector<2x128xf32>
      %138 = vector.broadcast %117 : vector<1x128xf32> to vector<2x128xf32>
      %139 = arith.addf %137, %138 : vector<2x128xf32>
      %cst_70 = arith.constant 0.000000e+00 : f32
      %140 = vector.broadcast %cst_70 : f32 to vector<2x128xf32>
      %141 = arith.maximumf %139, %140 : vector<2x128xf32>
      %142 = arith.truncf %141 : vector<2x128xf32> to vector<2x128xbf16>
      %c0_71 = arith.constant 0 : index
      %c0_72 = arith.constant 0 : index
      %143 = vector.load %arg13[%c0_71, %c0_72] : memref<128x128xbf16, #tpu.memory_space<vmem>>, vector<128x128xbf16>
      %cst_73 = arith.constant dense<0.000000e+00> : vector<2x128xf32>
      %144 = tpu.matmul %142, %143, %cst_73 {dimension_numbers = #tpu.dot_dimension_numbers<[1], [0], [0], [1], [0, 0, 1, 1], [], []>} : vector<2x128xbf16>, vector<128x128xbf16>, vector<2x128xf32> -> vector<2x128xf32>
      %c0_74 = arith.constant 0 : index
      %c0_75 = arith.constant 0 : index
      %145 = vector.load %arg14[%c0_74, %c0_75] : memref<1x128xf32, #tpu.memory_space<vmem>>, vector<1x128xf32>
      %146 = vector.broadcast %145 : vector<1x128xf32> to vector<2x128xf32>
      %147 = arith.addf %144, %146 : vector<2x128xf32>
      %c0_76 = arith.constant 0 : index
      %c0_77 = arith.constant 0 : index
      %148 = vector.load %arg17[%c0_76, %c0_77] : memref<2x128xf32, #tpu.memory_space<vmem>>, vector<2x128xf32>
      tpu.vector_store %arg17[%c0_76, %c0_77], %147 {strides = array<i32>} : memref<2x128xf32, #tpu.memory_space<vmem>>, vector<2x128xf32>,
    } else {
    }
    return
  }
  func.func @transform_0(%arg0: i32) -> (i32, i32, i32) {
    %c0_i32 = arith.constant 0 : i32
    %c0_i32_0 = arith.constant 0 : i32
    %c0_i32_1 = arith.constant 0 : i32
    return %c0_i32, %c0_i32_0, %arg0 : i32, i32, i32
  }
  func.func @transform_1(%arg0: i32) -> (i32, i32) {
    %c0_i32 = arith.constant 0 : i32
    %c0_i32_0 = arith.constant 0 : i32
    %c0_i32_1 = arith.constant 0 : i32
    return %c0_i32, %c0_i32_0 : i32, i32
  }
  func.func @transform_2(%arg0: i32) -> (i32, i32) {
    %c0_i32 = arith.constant 0 : i32
    %c0_i32_0 = arith.constant 0 : i32
    %c0_i32_1 = arith.constant 0 : i32
    return %c0_i32, %c0_i32_0 : i32, i32
  }
  func.func @transform_3(%arg0: i32) -> (i32, i32) {
    %c0_i32 = arith.constant 0 : i32
    %c0_i32_0 = arith.constant 0 : i32
    %c0_i32_1 = arith.constant 0 : i32
    return %c0_i32, %c0_i32_0 : i32, i32
  }
  func.func @transform_4(%arg0: i32) -> (i32, i32) {
    %c0_i32 = arith.constant 0 : i32
    %c0_i32_0 = arith.constant 0 : i32
    %c0_i32_1 = arith.constant 0 : i32
    return %c0_i32, %c0_i32_0 : i32, i32
  }
  func.func @transform_5(%arg0: i32) -> (i32, i32) {
    %c0_i32 = arith.constant 0 : i32
    %c0_i32_0 = arith.constant 0 : i32
    %c0_i32_1 = arith.constant 0 : i32
    return %c0_i32, %c0_i32_0 : i32, i32
  }
  func.func @transform_6(%arg0: i32) -> (i32, i32) {
    %c0_i32 = arith.constant 0 : i32
    %c0_i32_0 = arith.constant 0 : i32
    %c0_i32_1 = arith.constant 0 : i32
    return %c0_i32, %c0_i32_0 : i32, i32
  }
  func.func @transform_7(%arg0: i32) -> (i32, i32) {
    %c0_i32 = arith.constant 0 : i32
    %c0_i32_0 = arith.constant 0 : i32
    %c0_i32_1 = arith.constant 0 : i32
    return %c0_i32, %c0_i32_0 : i32, i32
  }
  func.func @transform_8(%arg0: i32) -> (i32, i32) {
    %c0_i32 = arith.constant 0 : i32
    %c0_i32_0 = arith.constant 0 : i32
    %c0_i32_1 = arith.constant 0 : i32
    return %c0_i32, %c0_i32_0 : i32, i32
  }
  func.func @transform_9(%arg0: i32) -> (i32, i32) {
    %c0_i32 = arith.constant 0 : i32
    %c0_i32_0 = arith.constant 0 : i32
    %c0_i32_1 = arith.constant 0 : i32
    return %c0_i32, %c0_i32_0 : i32, i32
  }
  func.func @transform_10(%arg0: i32) -> (i32, i32) {
    %c0_i32 = arith.constant 0 : i32
    %c0_i32_0 = arith.constant 0 : i32
    %c0_i32_1 = arith.constant 0 : i32
    return %c0_i32, %c0_i32_0 : i32, i32
  }
  func.func @transform_11(%arg0: i32) -> (i32, i32) {
    %c0_i32 = arith.constant 0 : i32
    %c0_i32_0 = arith.constant 0 : i32
    %c0_i32_1 = arith.constant 0 : i32
    return %c0_i32, %c0_i32_0 : i32, i32
  }
  func.func @transform_12(%arg0: i32) -> (i32, i32) {
    %c0_i32 = arith.constant 0 : i32
    %c0_i32_0 = arith.constant 0 : i32
    %c0_i32_1 = arith.constant 0 : i32
    return %c0_i32, %c0_i32_0 : i32, i32
  }
  func.func @transform_13(%arg0: i32) -> (i32, i32) {
    %c0_i32 = arith.constant 0 : i32
    %c0_i32_0 = arith.constant 0 : i32
    %c0_i32_1 = arith.constant 0 : i32
    return %c0_i32, %c0_i32_0 : i32, i32
  }
  func.func @transform_14(%arg0: i32) -> (i32, i32) {
    %c0_i32 = arith.constant 0 : i32
    %c0_i32_0 = arith.constant 0 : i32
    %c0_i32_1 = arith.constant 0 : i32
    return %c0_i32, %c0_i32_0 : i32, i32
  }
  func.func @transform_15(%arg0: i32) -> (i32, i32) {
    %c0_i32 = arith.constant 0 : i32
    %c0_i32_0 = arith.constant 0 : i32
    %c0_i32_1 = arith.constant 0 : i32
    return %c0_i32, %c0_i32_0 : i32, i32
  }
  func.func @transform_16(%arg0: i32) -> (i32, i32) {
    %c0_i32 = arith.constant 0 : i32
    %c0_i32_0 = arith.constant 0 : i32
    %c0_i32_1 = arith.constant 0 : i32
    return %c0_i32, %c0_i32_0 : i32, i32
  }
}

</mosaic_0001>

<llo_original>
// kernel: simsiam_forward.1
$region0: #{simsiam_forward.1}
  #allocation0 [shape = 'u32[]', space=smem, size = 0x4, offset = 0x4, fixed_abs, tag = 'smem constant byte address 0x4 - core index']
  #allocation1 [shape = 'u32[72,128]{1,0:T(1,128)}', space=vmem, size = 0x9000, scoped, tag = 'internal scratch']
  #allocation2 [shape = 'f32[2,128]{1,0:T(2,128)}', space=vmem, size = 0x400, scoped, tag = 'scratch operand']
  %s0 = inlined_call_operand.vmem [shape: bf16[2,4,256], index: 0, kind: input, shape index: {}]
  %s1 = inlined_call_operand.vmem [shape: f32[4,128], index: 1, kind: input, shape index: {}]
  %s2 = inlined_call_operand.vmem [shape: bf16[128,512], index: 2, kind: input, shape index: {}]
  %s3 = inlined_call_operand.vmem [shape: f32[1,512], index: 3, kind: input, shape index: {}]
  %s4 = inlined_call_operand.vmem [shape: f32[1,512], index: 4, kind: input, shape index: {}]
  %s5 = inlined_call_operand.vmem [shape: bf16[512,512], index: 5, kind: input, shape index: {}]
  %s6 = inlined_call_operand.vmem [shape: f32[1,512], index: 6, kind: input, shape index: {}]
  %s7 = inlined_call_operand.vmem [shape: f32[1,512], index: 7, kind: input, shape index: {}]
  %s8 = inlined_call_operand.vmem [shape: bf16[512,128], index: 8, kind: input, shape index: {}]
  %s9 = inlined_call_operand.vmem [shape: bf16[128,128], index: 9, kind: input, shape index: {}]
  %s10 = inlined_call_operand.vmem [shape: f32[1,128], index: 10, kind: input, shape index: {}]
  %s11 = inlined_call_operand.vmem [shape: f32[1,128], index: 11, kind: input, shape index: {}]
  %s12 = inlined_call_operand.vmem [shape: bf16[128,128], index: 12, kind: input, shape index: {}]
  %s13 = inlined_call_operand.vmem [shape: f32[1,128], index: 13, kind: input, shape index: {}]
  %s14 = inlined_call_operand.hbm [shape: f32[2,128], index: 14, kind: output, shape index: {0}]
  %s15 = inlined_call_operand.hbm [shape: f32[2,128], index: 15, kind: output, shape index: {1}]
  %s16 = inlined_call_operand.hbm [shape: f32[2,128], index: 16, kind: output, shape index: {2}]
  %17 = xla_tuple %s14, %s15, %s16
  %s18 = sld [smem:[#allocation0]]
  $region147: #{simsiam_forward.1} parent=0
    _
  %s20 = ssub.s32 1, %s18
  %s21 = scalar_select 0, %s20, %s18
  $region1: #{simsiam_forward.1} parent=0
    #allocation3 [shape = 'u8[4096]{0}', space=vmem, size = 0x1000, scoped, tag = 'input window, operand 0']
    #allocation4 [shape = 'u8[1024]{0}', space=vmem, size = 0x400, scoped, tag = 'output window, operand 0, single buffered']
    #allocation5 [shape = 's32[2]{0}', space=sflag, size = 0x8, scoped, tag = 'scoped memory for simsiam_forward.1']
    #allocation6 [shape = 'u8[1024]{0}', space=vmem, size = 0x400, scoped, tag = 'output window, operand 1, single buffered']
    #allocation7 [shape = 's32[1]{0}', space=sflag, size = 0x4, scoped, tag = 'scoped memory for simsiam_forward.1']
    #allocation8 [shape = 'u8[1024]{0}', space=vmem, size = 0x400, scoped, tag = 'output window, operand 2, single buffered']
    %22 = vsyncpa [#allocation5], 0
    %23 = vsyncpa [#allocation7], 0
    loop: start=0, step=1, limit=4
    $region2: #{simsiam_forward.1} parent=1 // loop_pre_header
      _
    $region3: #{simsiam_forward.1} parent=1 // loop_header
      %s25 = sphi 0, %s29
      %p26 = scmp.ge.s32.totalorder %s25, 4
      %s35 = sphi 0, %s37
      %s38 = sphi 0, %s35
      %s39 = sphi 0, %s38
      %s55 = sphi 0, %s39
      %s59 = sphi 0, %s59
      %s61 = sphi 0, %s59
      %s62 = sphi 0, %s61
      %s76 = sphi 0, %s62
      %s80 = sphi 0, %s80
      %s82 = sphi 0, %s80
      %s83 = sphi 0, %s82
      %s97 = sphi 0, %s83
      %s101 = sphi 0, %s101
      %s103 = sphi 0, %s101
      %s104 = sphi 0, %s103
      %s118 = sphi 0, %s104
      %s122 = sphi 0, %s122
      %s124 = sphi 0, %s122
      %s125 = sphi 0, %s124
      %s139 = sphi 0, %s125
      %s143 = sphi 0, %s143
      %s145 = sphi 0, %s143
      %s146 = sphi 0, %s145
      %s160 = sphi 0, %s146
      %s164 = sphi 0, %s164
      %s166 = sphi 0, %s164
      %s167 = sphi 0, %s166
      %s181 = sphi 0, %s167
      %s185 = sphi 0, %s185
      %s187 = sphi 0, %s185
      %s188 = sphi 0, %s187
      %s202 = sphi 0, %s188
      %s206 = sphi 0, %s206
      %s208 = sphi 0, %s206
      %s209 = sphi 0, %s208
      %s223 = sphi 0, %s209
      %s227 = sphi 0, %s227
      %s229 = sphi 0, %s227
      %s230 = sphi 0, %s229
      %s244 = sphi 0, %s230
      %s248 = sphi 0, %s248
      %s250 = sphi 0, %s248
      %s251 = sphi 0, %s250
      %s265 = sphi 0, %s251
      %s269 = sphi 0, %s269
      %s271 = sphi 0, %s269
      %s272 = sphi 0, %s271
      %s286 = sphi 0, %s272
      %s290 = sphi 0, %s290
      %s292 = sphi 0, %s290
      %s293 = sphi 0, %s292
      %s307 = sphi 0, %s293
      %s311 = sphi 0, %s311
      %s313 = sphi 0, %s311
      %s314 = sphi 0, %s313
      %s328 = sphi 0, %s314
      %s332 = sphi 0, %s332
      %s334 = sphi 0, %s332
      %s335 = sphi 0, %s334
      %s349 = sphi 0, %s335
      %s353 = sphi 0, %s353
      %s355 = sphi 0, %s353
      %s356 = sphi 0, %s355
      %s370 = sphi 0, %s356
      %s374 = sphi 0, %s374
      %s376 = sphi 0, %s374
      %s377 = sphi 0, %s376
      %s391 = sphi 0, %s377
    $region4: #{simsiam_forward.1} parent=1 // loop_header_branch
      %28 = sbr.rel (%p26) target = $region8
    $region5: #{simsiam_forward.1} parent=1 // loop_body
      %s30 = ssub.s32 %s25, 1
      %s31 = ssub.s32 %s25, 2
      %s32 = sadd.s32 %s25, 1
      %s33 = ssub.s32 %s25, %s32
      %p34 = scmp.eq.s32.totalorder %s33, 0
      %s36 = sadd.s32 %s35, 1
      %s37 = scalar_select %p34, %s35, %s36
      %p40 = pneg %p34
      %p41 = scmp.eq.s32.totalorder %s25, 1
      %p42 = por %p40, %p41
      %p43 = scmp.ne.s32.totalorder %s35, %s38
      %p44 = scmp.eq.s32.totalorder %s25, 0
      %p45 = por %p43, %p44
      %p46 = scmp.ne.s32.totalorder %s35, %s38
      %p47 = scmp.eq.s32.totalorder %s30, 1
      %p48 = por %p46, %p47
      %p49 = scmp.ne.s32.totalorder %s38, %s39
      %p50 = scmp.eq.s32.totalorder %s30, 0
      %p51 = por %p49, %p50
      %p52 = scmp.ne.s32.totalorder %s38, %s39
      %p53 = scmp.eq.s32.totalorder %s31, 1
      %p54 = por %p52, %p53
      %p56 = scmp.ne.s32.totalorder %s39, %s55
      %p57 = scmp.eq.s32.totalorder %s31, 0
      %p58 = por %p56, %p57
      %s60 = sadd.s32 %s59, 1
      %p63 = scmp.eq.s32.totalorder %s25, 1
      %p64 = scmp.ne.s32.totalorder %s59, %s61
      %p65 = scmp.eq.s32.totalorder %s25, 0
      %p66 = por %p64, %p65
      %p67 = scmp.ne.s32.totalorder %s59, %s61
      %p68 = scmp.eq.s32.totalorder %s30, 1
      %p69 = por %p67, %p68
      %p70 = scmp.ne.s32.totalorder %s61, %s62
      %p71 = scmp.eq.s32.totalorder %s30, 0
      %p72 = por %p70, %p71
      %p73 = scmp.ne.s32.totalorder %s61, %s62
      %p74 = scmp.eq.s32.totalorder %s31, 1
      %p75 = por %p73, %p74
      %p77 = scmp.ne.s32.totalorder %s62, %s76
      %p78 = scmp.eq.s32.totalorder %s31, 0
      %p79 = por %p77, %p78
      %s81 = sadd.s32 %s80, 1
      %p84 = scmp.eq.s32.totalorder %s25, 1
      %p85 = scmp.ne.s32.totalorder %s80, %s82
      %p86 = scmp.eq.s32.totalorder %s25, 0
      %p87 = por %p85, %p86
      %p88 = scmp.ne.s32.totalorder %s80, %s82
      %p89 = scmp.eq.s32.totalorder %s30, 1
      %p90 = por %p88, %p89
      %p91 = scmp.ne.s32.totalorder %s82, %s83
      %p92 = scmp.eq.s32.totalorder %s30, 0
      %p93 = por %p91, %p92
      %p94 = scmp.ne.s32.totalorder %s82, %s83
      %p95 = scmp.eq.s32.totalorder %s31, 1
      %p96 = por %p94, %p95
      %p98 = scmp.ne.s32.totalorder %s83, %s97
      %p99 = scmp.eq.s32.totalorder %s31, 0
      %p100 = por %p98, %p99
      %s102 = sadd.s32 %s101, 1
      %p105 = scmp.eq.s32.totalorder %s25, 1
      %p106 = scmp.ne.s32.totalorder %s101, %s103
      %p107 = scmp.eq.s32.totalorder %s25, 0
      %p108 = por %p106, %p107
      %p109 = scmp.ne.s32.totalorder %s101, %s103
      %p110 = scmp.eq.s32.totalorder %s30, 1
      %p111 = por %p109, %p110
      %p112 = scmp.ne.s32.totalorder %s103, %s104
      %p113 = scmp.eq.s32.totalorder %s30, 0
      %p114 = por %p112, %p113
      %p115 = scmp.ne.s32.totalorder %s103, %s104
      %p116 = scmp.eq.s32.totalorder %s31, 1
      %p117 = por %p115, %p116
      %p119 = scmp.ne.s32.totalorder %s104, %s118
      %p120 = scmp.eq.s32.totalorder %s31, 0
      %p121 = por %p119, %p120
      %s123 = sadd.s32 %s122, 1
      %p126 = scmp.eq.s32.totalorder %s25, 1
      %p127 = scmp.ne.s32.totalorder %s122, %s124
      %p128 = scmp.eq.s32.totalorder %s25, 0
      %p129 = por %p127, %p128
      %p130 = scmp.ne.s32.totalorder %s122, %s124
      %p131 = scmp.eq.s32.totalorder %s30, 1
      %p132 = por %p130, %p131
      %p133 = scmp.ne.s32.totalorder %s124, %s125
      %p134 = scmp.eq.s32.totalorder %s30, 0
      %p135 = por %p133, %p134
      %p136 = scmp.ne.s32.totalorder %s124, %s125
      %p137 = scmp.eq.s32.totalorder %s31, 1
      %p138 = por %p136, %p137
      %p140 = scmp.ne.s32.totalorder %s125, %s139
      %p141 = scmp.eq.s32.totalorder %s31, 0
      %p142 = por %p140, %p141
      %s144 = sadd.s32 %s143, 1
      %p147 = scmp.eq.s32.totalorder %s25, 1
      %p148 = scmp.ne.s32.totalorder %s143, %s145
      %p149 = scmp.eq.s32.totalorder %s25, 0
      %p150 = por %p148, %p149
      %p151 = scmp.ne.s32.totalorder %s143, %s145
      %p152 = scmp.eq.s32.totalorder %s30, 1
      %p153 = por %p151, %p152
      %p154 = scmp.ne.s32.totalorder %s145, %s146
      %p155 = scmp.eq.s32.totalorder %s30, 0
      %p156 = por %p154, %p155
      %p157 = scmp.ne.s32.totalorder %s145, %s146
      %p158 = scmp.eq.s32.totalorder %s31, 1
      %p159 = por %p157, %p158
      %p161 = scmp.ne.s32.totalorder %s146, %s160
      %p162 = scmp.eq.s32.totalorder %s31, 0
      %p163 = por %p161, %p162
      %s165 = sadd.s32 %s164, 1
      %p168 = scmp.eq.s32.totalorder %s25, 1
      %p169 = scmp.ne.s32.totalorder %s164, %s166
      %p170 = scmp.eq.s32.totalorder %s25, 0
      %p171 = por %p169, %p170
      %p172 = scmp.ne.s32.totalorder %s164, %s166
      %p173 = scmp.eq.s32.totalorder %s30, 1
      %p174 = por %p172, %p173
      %p175 = scmp.ne.s32.totalorder %s166, %s167
      %p176 = scmp.eq.s32.totalorder %s30, 0
      %p177 = por %p175, %p176
      %p178 = scmp.ne.s32.totalorder %s166, %s167
      %p179 = scmp.eq.s32.totalorder %s31, 1
      %p180 = por %p178, %p179
      %p182 = scmp.ne.s32.totalorder %s167, %s181
      %p183 = scmp.eq.s32.totalorder %s31, 0
      %p184 = por %p182, %p183
      %s186 = sadd.s32 %s185, 1
      %p189 = scmp.eq.s32.totalorder %s25, 1
      %p190 = scmp.ne.s32.totalorder %s185, %s187
      %p191 = scmp.eq.s32.totalorder %s25, 0
      %p192 = por %p190, %p191
      %p193 = scmp.ne.s32.totalorder %s185, %s187
      %p194 = scmp.eq.s32.totalorder %s30, 1
      %p195 = por %p193, %p194
      %p196 = scmp.ne.s32.totalorder %s187, %s188
      %p197 = scmp.eq.s32.totalorder %s30, 0
      %p198 = por %p196, %p197
      %p199 = scmp.ne.s32.totalorder %s187, %s188
      %p200 = scmp.eq.s32.totalorder %s31, 1
      %p201 = por %p199, %p200
      %p203 = scmp.ne.s32.totalorder %s188, %s202
      %p204 = scmp.eq.s32.totalorder %s31, 0
      %p205 = por %p203, %p204
      %s207 = sadd.s32 %s206, 1
      %p210 = scmp.eq.s32.totalorder %s25, 1
      %p211 = scmp.ne.s32.totalorder %s206, %s208
      %p212 = scmp.eq.s32.totalorder %s25, 0
      %p213 = por %p211, %p212
      %p214 = scmp.ne.s32.totalorder %s206, %s208
      %p215 = scmp.eq.s32.totalorder %s30, 1
      %p216 = por %p214, %p215
      %p217 = scmp.ne.s32.totalorder %s208, %s209
      %p218 = scmp.eq.s32.totalorder %s30, 0
      %p219 = por %p217, %p218
      %p220 = scmp.ne.s32.totalorder %s208, %s209
      %p221 = scmp.eq.s32.totalorder %s31, 1
      %p222 = por %p220, %p221
      %p224 = scmp.ne.s32.totalorder %s209, %s223
      %p225 = scmp.eq.s32.totalorder %s31, 0
      %p226 = por %p224, %p225
      %s228 = sadd.s32 %s227, 1
      %p231 = scmp.eq.s32.totalorder %s25, 1
      %p232 = scmp.ne.s32.totalorder %s227, %s229
      %p233 = scmp.eq.s32.totalorder %s25, 0
      %p234 = por %p232, %p233
      %p235 = scmp.ne.s32.totalorder %s227, %s229
      %p236 = scmp.eq.s32.totalorder %s30, 1
      %p237 = por %p235, %p236
      %p238 = scmp.ne.s32.totalorder %s229, %s230
      %p239 = scmp.eq.s32.totalorder %s30, 0
      %p240 = por %p238, %p239
      %p241 = scmp.ne.s32.totalorder %s229, %s230
      %p242 = scmp.eq.s32.totalorder %s31, 1
      %p243 = por %p241, %p242
      %p245 = scmp.ne.s32.totalorder %s230, %s244
      %p246 = scmp.eq.s32.totalorder %s31, 0
      %p247 = por %p245, %p246
      %s249 = sadd.s32 %s248, 1
      %p252 = scmp.eq.s32.totalorder %s25, 1
      %p253 = scmp.ne.s32.totalorder %s248, %s250
      %p254 = scmp.eq.s32.totalorder %s25, 0
      %p255 = por %p253, %p254
      %p256 = scmp.ne.s32.totalorder %s248, %s250
      %p257 = scmp.eq.s32.totalorder %s30, 1
      %p258 = por %p256, %p257
      %p259 = scmp.ne.s32.totalorder %s250, %s251
      %p260 = scmp.eq.s32.totalorder %s30, 0
      %p261 = por %p259, %p260
      %p262 = scmp.ne.s32.totalorder %s250, %s251
      %p263 = scmp.eq.s32.totalorder %s31, 1
      %p264 = por %p262, %p263
      %p266 = scmp.ne.s32.totalorder %s251, %s265
      %p267 = scmp.eq.s32.totalorder %s31, 0
      %p268 = por %p266, %p267
      %s270 = sadd.s32 %s269, 1
      %p273 = scmp.eq.s32.totalorder %s25, 1
      %p274 = scmp.ne.s32.totalorder %s269, %s271
      %p275 = scmp.eq.s32.totalorder %s25, 0
      %p276 = por %p274, %p275
      %p277 = scmp.ne.s32.totalorder %s269, %s271
      %p278 = scmp.eq.s32.totalorder %s30, 1
      %p279 = por %p277, %p278
      %p280 = scmp.ne.s32.totalorder %s271, %s272
      %p281 = scmp.eq.s32.totalorder %s30, 0
      %p282 = por %p280, %p281
      %p283 = scmp.ne.s32.totalorder %s271, %s272
      %p284 = scmp.eq.s32.totalorder %s31, 1
      %p285 = por %p283, %p284
      %p287 = scmp.ne.s32.totalorder %s272, %s286
      %p288 = scmp.eq.s32.totalorder %s31, 0
      %p289 = por %p287, %p288
      %s291 = sadd.s32 %s290, 1
      %p294 = scmp.eq.s32.totalorder %s25, 1
      %p295 = scmp.ne.s32.totalorder %s290, %s292
      %p296 = scmp.eq.s32.totalorder %s25, 0
      %p297 = por %p295, %p296
      %p298 = scmp.ne.s32.totalorder %s290, %s292
      %p299 = scmp.eq.s32.totalorder %s30, 1
      %p300 = por %p298, %p299
      %p301 = scmp.ne.s32.totalorder %s292, %s293
      %p302 = scmp.eq.s32.totalorder %s30, 0
      %p303 = por %p301, %p302
      %p304 = scmp.ne.s32.totalorder %s292, %s293
      %p305 = scmp.eq.s32.totalorder %s31, 1
      %p306 = por %p304, %p305
      %p308 = scmp.ne.s32.totalorder %s293, %s307
      %p309 = scmp.eq.s32.totalorder %s31, 0
      %p310 = por %p308, %p309
      %s312 = sadd.s32 %s311, 1
      %p315 = scmp.eq.s32.totalorder %s25, 1
      %p316 = scmp.ne.s32.totalorder %s311, %s313
      %p317 = scmp.eq.s32.totalorder %s25, 0
      %p318 = por %p316, %p317
      %p319 = scmp.ne.s32.totalorder %s311, %s313
      %p320 = scmp.eq.s32.totalorder %s30, 1
      %p321 = por %p319, %p320
      %p322 = scmp.ne.s32.totalorder %s313, %s314
      %p323 = scmp.eq.s32.totalorder %s30, 0
      %p324 = por %p322, %p323
      %p325 = scmp.ne.s32.totalorder %s313, %s314
      %p326 = scmp.eq.s32.totalorder %s31, 1
      %p327 = por %p325, %p326
      %p329 = scmp.ne.s32.totalorder %s314, %s328
      %p330 = scmp.eq.s32.totalorder %s31, 0
      %p331 = por %p329, %p330
      %s333 = sadd.s32 %s332, 1
      %p336 = scmp.eq.s32.totalorder %s25, 1
      %p337 = scmp.ne.s32.totalorder %s332, %s334
      %p338 = scmp.eq.s32.totalorder %s25, 0
      %p339 = por %p337, %p338
      %p340 = scmp.ne.s32.totalorder %s332, %s334
      %p341 = scmp.eq.s32.totalorder %s30, 1
      %p342 = por %p340, %p341
      %p343 = scmp.ne.s32.totalorder %s334, %s335
      %p344 = scmp.eq.s32.totalorder %s30, 0
      %p345 = por %p343, %p344
      %p346 = scmp.ne.s32.totalorder %s334, %s335
      %p347 = scmp.eq.s32.totalorder %s31, 1
      %p348 = por %p346, %p347
      %p350 = scmp.ne.s32.totalorder %s335, %s349
      %p351 = scmp.eq.s32.totalorder %s31, 0
      %p352 = por %p350, %p351
      %s354 = sadd.s32 %s353, 1
      %p357 = scmp.eq.s32.totalorder %s25, 1
      %p358 = scmp.ne.s32.totalorder %s353, %s355
      %p359 = scmp.eq.s32.totalorder %s25, 0
      %p360 = por %p358, %p359
      %p361 = scmp.ne.s32.totalorder %s353, %s355
      %p362 = scmp.eq.s32.totalorder %s30, 1
      %p363 = por %p361, %p362
      %p364 = scmp.ne.s32.totalorder %s355, %s356
      %p365 = scmp.eq.s32.totalorder %s30, 0
      %p366 = por %p364, %p365
      %p367 = scmp.ne.s32.totalorder %s355, %s356
      %p368 = scmp.eq.s32.totalorder %s31, 1
      %p369 = por %p367, %p368
      %p371 = scmp.ne.s32.totalorder %s356, %s370
      %p372 = scmp.eq.s32.totalorder %s31, 0
      %p373 = por %p371, %p372
      %s375 = sadd.s32 %s374, 1
      %p378 = scmp.eq.s32.totalorder %s25, 1
      %p379 = scmp.ne.s32.totalorder %s374, %s376
      %p380 = scmp.eq.s32.totalorder %s25, 0
      %p381 = por %p379, %p380
      %p382 = scmp.ne.s32.totalorder %s374, %s376
      %p383 = scmp.eq.s32.totalorder %s30, 1
      %p384 = por %p382, %p383
      %p385 = scmp.ne.s32.totalorder %s376, %s377
      %p386 = scmp.eq.s32.totalorder %s30, 0
      %p387 = por %p385, %p386
      %p388 = scmp.ne.s32.totalorder %s376, %s377
      %p389 = scmp.eq.s32.totalorder %s31, 1
      %p390 = por %p388, %p389
      %p392 = scmp.ne.s32.totalorder %s377, %s391
      %p393 = scmp.eq.s32.totalorder %s31, 0
      %p394 = por %p392, %p393
      %p395 = scmp.le.s32.totalorder 1, %s25
      %p396 = scmp.lt.s32.totalorder %s25, 3
      %p397 = pnand %p395, %p396
      %p398 = pneg %p397
      // Predicated region
      $region9: #{simsiam_forward.1} parent=5 // pred_check
        _
      $region10: #{simsiam_forward.1} parent=5 // pred_check_branch
        %400 = sbr.rel (%p397) target = $region12
      $region11: #{simsiam_forward.1} parent=5 // pred_region
        %s401 = ssub.s32 %s25, 1
        // Predicated region
        $region13: #{simsiam_forward.1} parent=11 // pred_check
          %p402 = pneg %p72
        $region14: #{simsiam_forward.1} parent=11 // pred_check_branch
          %404 = sbr.rel (%p402) target = $region16
        $region15: #{simsiam_forward.1} parent=11 // pred_region
          _
        $region16: #{simsiam_forward.1} parent=11 // pred_fallthru
          _
        // Predicated region
        $region17: #{simsiam_forward.1} parent=11 // pred_check
          %p405 = pneg %p93
        $region18: #{simsiam_forward.1} parent=11 // pred_check_branch
          %407 = sbr.rel (%p405) target = $region20
        $region19: #{simsiam_forward.1} parent=11 // pred_region
          _
        $region20: #{simsiam_forward.1} parent=11 // pred_fallthru
          _
        // Predicated region
        $region21: #{simsiam_forward.1} parent=11 // pred_check
          %p408 = pneg %p114
        $region22: #{simsiam_forward.1} parent=11 // pred_check_branch
          %410 = sbr.rel (%p408) target = $region24
        $region23: #{simsiam_forward.1} parent=11 // pred_region
          _
        $region24: #{simsiam_forward.1} parent=11 // pred_fallthru
          _
        // Predicated region
        $region25: #{simsiam_forward.1} parent=11 // pred_check
          %p411 = pneg %p135
        $region26: #{simsiam_forward.1} parent=11 // pred_check_branch
          %413 = sbr.rel (%p411) target = $region28
        $region27: #{simsiam_forward.1} parent=11 // pred_region
          _
        $region28: #{simsiam_forward.1} parent=11 // pred_fallthru
          _
        // Predicated region
        $region29: #{simsiam_forward.1} parent=11 // pred_check
          %p414 = pneg %p156
        $region30: #{simsiam_forward.1} parent=11 // pred_check_branch
          %416 = sbr.rel (%p414) target = $region32
        $region31: #{simsiam_forward.1} parent=11 // pred_region
          _
        $region32: #{simsiam_forward.1} parent=11 // pred_fallthru
          _
        // Predicated region
        $region33: #{simsiam_forward.1} parent=11 // pred_check
          %p417 = pneg %p177
        $region34: #{simsiam_forward.1} parent=11 // pred_check_branch
          %419 = sbr.rel (%p417) target = $region36
        $region35: #{simsiam_forward.1} parent=11 // pred_region
          _
        $region36: #{simsiam_forward.1} parent=11 // pred_fallthru
          _
        // Predicated region
        $region37: #{simsiam_forward.1} parent=11 // pred_check
          %p420 = pneg %p198
        $region38: #{simsiam_forward.1} parent=11 // pred_check_branch
          %422 = sbr.rel (%p420) target = $region40
        $region39: #{simsiam_forward.1} parent=11 // pred_region
          _
        $region40: #{simsiam_forward.1} parent=11 // pred_fallthru
          _
        // Predicated region
        $region41: #{simsiam_forward.1} parent=11 // pred_check
          %p423 = pneg %p219
        $region42: #{simsiam_forward.1} parent=11 // pred_check_branch
          %425 = sbr.rel (%p423) target = $region44
        $region43: #{simsiam_forward.1} parent=11 // pred_region
          _
        $region44: #{simsiam_forward.1} parent=11 // pred_fallthru
          _
        // Predicated region
        $region45: #{simsiam_forward.1} parent=11 // pred_check
          %p426 = pneg %p240
        $region46: #{simsiam_forward.1} parent=11 // pred_check_branch
          %428 = sbr.rel (%p426) target = $region48
        $region47: #{simsiam_forward.1} parent=11 // pred_region
          _
        $region48: #{simsiam_forward.1} parent=11 // pred_fallthru
          _
        // Predicated region
        $region49: #{simsiam_forward.1} parent=11 // pred_check
          %p429 = pneg %p261
        $region50: #{simsiam_forward.1} parent=11 // pred_check_branch
          %431 = sbr.rel (%p429) target = $region52
        $region51: #{simsiam_forward.1} parent=11 // pred_region
          _
        $region52: #{simsiam_forward.1} parent=11 // pred_fallthru
          _
        // Predicated region
        $region53: #{simsiam_forward.1} parent=11 // pred_check
          %p432 = pneg %p282
        $region54: #{simsiam_forward.1} parent=11 // pred_check_branch
          %434 = sbr.rel (%p432) target = $region56
        $region55: #{simsiam_forward.1} parent=11 // pred_region
          _
        $region56: #{simsiam_forward.1} parent=11 // pred_fallthru
          _
        // Predicated region
        $region57: #{simsiam_forward.1} parent=11 // pred_check
          %p435 = pneg %p303
        $region58: #{simsiam_forward.1} parent=11 // pred_check_branch
          %437 = sbr.rel (%p435) target = $region60
        $region59: #{simsiam_forward.1} parent=11 // pred_region
          _
        $region60: #{simsiam_forward.1} parent=11 // pred_fallthru
          _
        // Predicated region
        $region61: #{simsiam_forward.1} parent=11 // pred_check
          %p438 = pneg %p324
        $region62: #{simsiam_forward.1} parent=11 // pred_check_branch
          %440 = sbr.rel (%p438) target = $region64
        $region63: #{simsiam_forward.1} parent=11 // pred_region
          _
        $region64: #{simsiam_forward.1} parent=11 // pred_fallthru
          _
      $region12: #{simsiam_forward.1} parent=5 // pred_fallthru
        _
      %p441 = scmp.lt.s32.totalorder %s25, 2
      // Predicated region
      $region65: #{simsiam_forward.1} parent=5 // pred_check
        %p442 = pneg %p441
      $region66: #{simsiam_forward.1} parent=5 // pred_check_branch
        %444 = sbr.rel (%p442) target = $region68
      $region67: #{simsiam_forward.1} parent=5 // pred_region
        // Predicated region
        $region69: #{simsiam_forward.1} parent=67 // pred_check
          %p445 = pneg %p45
        $region70: #{simsiam_forward.1} parent=67 // pred_check_branch
          %447 = sbr.rel (%p445) target = $region72
        $region71: #{simsiam_forward.1} parent=67 // pred_region
          %s448 = sand.u32 %s35, 1
          %s449 = sand.u32 %s35, 1
          %s450 = smul.addr %s449, 4
          %s451 = scalar_lea.vmem [#allocation3], %s450
          %s452 = smul.addr %s25, 2
          %s453 = scalar_lea.vmem %s0, %s452
          // Predicated region
          $region73: #{simsiam_forward.1} parent=71 // pred_check
            _
          $region74: #{simsiam_forward.1} parent=71 // pred_check_branch
            %455 = sbr.rel (0) target = $region76
          $region75: #{simsiam_forward.1} parent=71 // pred_region
            // Predicated region
            $region77: #{simsiam_forward.1} parent=75 // pred_check
              _
            $region78: #{simsiam_forward.1} parent=75 // pred_check_branch
              %457 = sbr.rel target = $region80
            $region79: #{simsiam_forward.1} parent=75 // pred_region
              // Predicated region
              $region92: #{simsiam_forward.1} parent=79 // pred_check
                _
              $region93: #{simsiam_forward.1} parent=79 // pred_check_branch
                %475 = sbr.rel (0) target = $region95
              $region94: #{simsiam_forward.1} parent=79 // pred_region
                %s477 = ssub.s32 4, 1
                loop: start=0, step=1, limit=1
                $region96: #{simsiam_forward.1} parent=94 // loop_pre_header
                  _
                $region97: #{simsiam_forward.1} parent=94 // loop_header
                  %s479 = sphi 0, %s483
                  %p480 = scmp.ge.s32.totalorder %s479, 1
                  %s484 = sphi %s453, %s453
                  %s485 = sphi %s451, %s451
                $region98: #{simsiam_forward.1} parent=94 // loop_header_branch
                  %482 = sbr.rel (%p480) target = $region102
                $region99: #{simsiam_forward.1} parent=94 // loop_body
                  %v486 = vld [vmem:[%s484] sm:%s477]
                  %487 = vst [vmem:[%s485] sm:%s477] %v486
                  %v488 = vld [vmem:[%s484 + $0x4] sm:%s477]
                  %489 = vst [vmem:[%s485 + $0x2] sm:%s477] %v488
                $region100: #{simsiam_forward.1} parent=94 // loop_footer
                  %s483 = sadd.s32 1, %s479
                $region101: #{simsiam_forward.1} parent=94 // loop_footer_branch
                  %478 = sbr.rel target = $region97
                $region102: #{simsiam_forward.1} parent=94 // loop_exit
                  _
              $region95: #{simsiam_forward.1} parent=79 // pred_fallthru
                _
            $region80: #{simsiam_forward.1} parent=75 // pred_fallthru
              _
            // Predicated region
            $region81: #{simsiam_forward.1} parent=75 // pred_check
              _
            $region82: #{simsiam_forward.1} parent=75 // pred_check_branch
              %459 = sbr.rel (0) target = $region84
            $region83: #{simsiam_forward.1} parent=75 // pred_region
              %s461 = ssub.s32 4, 1
              loop: start=0, step=1, limit=1
              $region85: #{simsiam_forward.1} parent=83 // loop_pre_header
                _
              $region86: #{simsiam_forward.1} parent=83 // loop_header
                %s463 = sphi 0, %s467
                %p464 = scmp.ge.s32.totalorder %s463, 1
                %s468 = sphi %s453, %s453
                %s469 = sphi %s451, %s451
              $region87: #{simsiam_forward.1} parent=83 // loop_header_branch
                %466 = sbr.rel (%p464) target = $region91
              $region88: #{simsiam_forward.1} parent=83 // loop_body
                %v470 = vld [vmem:[%s468] sm:%s461]
                %471 = vst [vmem:[%s469] sm:%s461] %v470
                %v472 = vld [vmem:[%s468 + $0x4] sm:%s461]
                %473 = vst [vmem:[%s469 + $0x2] sm:%s461] %v472
              $region89: #{simsiam_forward.1} parent=83 // loop_footer
                %s467 = sadd.s32 1, %s463
              $region90: #{simsiam_forward.1} parent=83 // loop_footer_branch
                %462 = sbr.rel target = $region86
              $region91: #{simsiam_forward.1} parent=83 // loop_exit
                _
            $region84: #{simsiam_forward.1} parent=75 // pred_fallthru
              _
          $region76: #{simsiam_forward.1} parent=71 // pred_fallthru
            _
          %490 = vnop
        $region72: #{simsiam_forward.1} parent=67 // pred_fallthru
          _
      $region68: #{simsiam_forward.1} parent=5 // pred_fallthru
        _
      %p491 = scmp.le.s32.totalorder 1, %s25
      %p492 = scmp.lt.s32.totalorder %s25, 3
      %p493 = pnand %p491, %p492
      %p494 = pneg %p493
      // Predicated region
      $region103: #{simsiam_forward.1} parent=5 // pred_check
        _
      $region104: #{simsiam_forward.1} parent=5 // pred_check_branch
        %496 = sbr.rel (%p493) target = $region106
      $region105: #{simsiam_forward.1} parent=5 // pred_region
        %s497 = ssub.s32 %s25, 1
        %s498 = sand.u32 %s38, 1
        %s499 = sand.u32 %s38, 1
        %s500 = smul.addr %s499, 4
        %s501 = scalar_lea.vmem [#allocation3], %s500
        // Predicated region
        $region107: #{simsiam_forward.1} parent=105 // pred_check
          %p502 = pneg %p51
        $region108: #{simsiam_forward.1} parent=105 // pred_check_branch
          %504 = sbr.rel (%p502) target = $region110
        $region109: #{simsiam_forward.1} parent=105 // pred_region
          _
        $region110: #{simsiam_forward.1} parent=105 // pred_fallthru
          _
        %s505 = sand.u32 %s38, 1
        %s506 = sand.u32 %s38, 1
        %s507 = smul.addr %s506, 4
        %s508 = scalar_lea.vmem [#allocation3], %s507
        %p509 = pneg %p51
        %p510 = pneg %p48
        %p511 = pneg %p72
        %p512 = pneg %p69
        %p513 = pneg %p93
        %p514 = pneg %p90
        %p515 = pneg %p114
        %p516 = pneg %p111
        %p517 = pneg %p135
        %p518 = pneg %p132
        %p519 = pneg %p156
        %p520 = pneg %p153
        %p521 = pneg %p177
        %p522 = pneg %p174
        %p523 = pneg %p198
        %p524 = pneg %p195
        %p525 = pneg %p219
        %p526 = pneg %p216
        %p527 = pneg %p240
        %p528 = pneg %p237
        %p529 = pneg %p261
        %p530 = pneg %p258
        %p531 = pneg %p282
        %p532 = pneg %p279
        %p533 = pneg %p303
        %p534 = pneg %p300
        %p535 = pneg %p324
        %p536 = pneg %p321
        %p537 = pneg %p345
        %p538 = pneg %p342
        %p539 = pneg %p366
        %p540 = pneg %p363
        %p541 = pneg %p387
        %p542 = pneg %p384
        %p543 = scmp.eq.s32.totalorder %s30, 0
        // Predicated region
        $region111: #{simsiam_forward.1} parent=105 // pred_check
          %p544 = pneg %p543
        $region112: #{simsiam_forward.1} parent=105 // pred_check_branch
          %546 = sbr.rel (%p544) target = $region114
        $region113: #{simsiam_forward.1} parent=105 // pred_region
          %547 = vst [vmem:[#allocation2] sm:$0x3] 0.0
        $region114: #{simsiam_forward.1} parent=105 // pred_fallthru
          _
        %v548 = vld [vmem:[%s1] sm:$0xf]
        %v549 = vld [vmem:[%s501] sm:$0x3]
        %v550 = vunpack.c.l.bf16 %v549
        %551 = vxpose.xlu0.b32.start [1/16] %v550, 128
        %552 = vxpose.xlu0.b32.cont [2/16] 0.0, 128
        %553 = vxpose.xlu0.b32.cont [3/16] 0.0, 128
        %554 = vxpose.xlu0.b32.cont [4/16] 0.0, 128
        %555 = vxpose.xlu0.b32.cont [5/16] 0.0, 128
        %556 = vxpose.xlu0.b32.cont [6/16] 0.0, 128
        %557 = vxpose.xlu0.b32.cont [7/16] 0.0, 128
        %558 = vxpose.xlu0.b32.cont [8/16] 0.0, 128
        %559 = vxpose.xlu0.b32.cont [9/16] 0.0, 128
        %560 = vxpose.xlu0.b32.cont [10/16] 0.0, 128
        %561 = vxpose.xlu0.b32.cont [11/16] 0.0, 128
        %562 = vxpose.xlu0.b32.cont [12/16] 0.0, 128
        %563 = vxpose.xlu0.b32.cont [13/16] 0.0, 128
        %564 = vxpose.xlu0.b32.cont [14/16] 0.0, 128
        %565 = vxpose.xlu0.b32.cont [15/16] 0.0, 128
        %566 = vxpose.xlu0.b32.end [16/16] 0.0, 128
        %v567 = vpop.trf.xlu0
        %v568 = vpop.trf.xlu0
        %v569 = vpop.trf.xlu0
        %v570 = vpop.trf.xlu0
        %v571 = vpop.trf.xlu0
        %v572 = vpop.trf.xlu0
        %v573 = vpop.trf.xlu0
        %v574 = vpop.trf.xlu0
        %v575 = vpop.trf.xlu0
        %v576 = vpop.trf.xlu0
        %v577 = vpop.trf.xlu0
        %v578 = vpop.trf.xlu0
        %v579 = vpop.trf.xlu0
        %v580 = vpop.trf.xlu0
        %v581 = vpop.trf.xlu0
        %v582 = vpop.trf.xlu0
        %vm583 = vcmask 31744
        %v585 = vsel %vm583, %v567, 0
        %v588 = vsel %vm583, %v568, 0
        %v591 = vsel %vm583, %v569, 0
        %v594 = vsel %vm583, %v570, 0
        %v597 = vsel %vm583, %v571, 0
        %v600 = vsel %vm583, %v572, 0
        %v603 = vsel %vm583, %v573, 0
        %v606 = vsel %vm583, %v574, 0
        %v609 = vsel %vm583, %v575, 0
        %v612 = vsel %vm583, %v576, 0
        %v615 = vsel %vm583, %v577, 0
        %v618 = vsel %vm583, %v578, 0
        %v621 = vsel %vm583, %v579, 0
        %v624 = vsel %vm583, %v580, 0
        %v627 = vsel %vm583, %v581, 0
        %v630 = vsel %vm583, %v582, 0
        %vm632 = vcmask 1043456
        %v634 = vsel %vm632, %v548, 0
        %636 = vmatpush.msra.mxu0 0.0
        %637 = vmatpush.msra.mxu0 0.0
        %638 = vmatpush.msra.mxu0 0.0
        %639 = vmatpush.msra.mxu0 0.0
        %640 = vmatpush.msra.mxu0 0.0
        %641 = vmatpush.msra.mxu0 0.0
        %642 = vmatpush.msra.mxu0 0.0
        %643 = vmatpush.msra.mxu0 0.0
        %644 = vmatpush.msra.mxu0 0.0
        %645 = vmatpush.msra.mxu0 0.0
        %646 = vmatpush.msra.mxu0 0.0
        %647 = vmatpush.msra.mxu0 0.0
        %648 = vmatpush.msra.mxu0 0.0
        %649 = vmatpush.msra.mxu0 0.0
        %650 = vmatpush.msra.mxu0 0.0
        %651 = vmatpush.msra.mxu0 %v634
        %652 = vmatmul.f32.gmra.mxu0 %v585
        %v653 = vpop.f32.mrf.mxu0
        %v654 = vadd.f32 0.0, %v653
        %655 = vmatmul.f32.gmra.mxu0 %v588
        %v656 = vpop.f32.mrf.mxu0
        %v657 = vadd.f32 0.0, %v656
        %658 = vmatmul.f32.gmra.mxu0 %v591
        %v659 = vpop.f32.mrf.mxu0
        %v660 = vadd.f32 0.0, %v659
        %661 = vmatmul.f32.gmra.mxu0 %v594
        %v662 = vpop.f32.mrf.mxu0
        %v663 = vadd.f32 0.0, %v662
        %664 = vmatmul.f32.gmra.mxu0 %v597
        %v665 = vpop.f32.mrf.mxu0
        %v666 = vadd.f32 0.0, %v665
        %667 = vmatmul.f32.gmra.mxu0 %v600
        %v668 = vpop.f32.mrf.mxu0
        %v669 = vadd.f32 0.0, %v668
        %670 = vmatmul.f32.gmra.mxu0 %v603
        %v671 = vpop.f32.mrf.mxu0
        %v672 = vadd.f32 0.0, %v671
        %673 = vmatmul.f32.gmra.mxu0 %v606
        %v674 = vpop.f32.mrf.mxu0
        %v675 = vadd.f32 0.0, %v674
        %676 = vmatmul.f32.gmra.mxu0 %v609
        %v677 = vpop.f32.mrf.mxu0
        %v678 = vadd.f32 0.0, %v677
        %679 = vmatmul.f32.gmra.mxu0 %v612
        %v680 = vpop.f32.mrf.mxu0
        %v681 = vadd.f32 0.0, %v680
        %682 = vmatmul.f32.gmra.mxu0 %v615
        %v683 = vpop.f32.mrf.mxu0
        %v684 = vadd.f32 0.0, %v683
        %685 = vmatmul.f32.gmra.mxu0 %v618
        %v686 = vpop.f32.mrf.mxu0
        %v687 = vadd.f32 0.0, %v686
        %688 = vmatmul.f32.gmra.mxu0 %v621
        %v689 = vpop.f32.mrf.mxu0
        %v690 = vadd.f32 0.0, %v689
        %691 = vmatmul.f32.gmra.mxu0 %v624
        %v692 = vpop.f32.mrf.mxu0
        %v693 = vadd.f32 0.0, %v692
        %694 = vmatmul.f32.gmra.mxu0 %v627
        %v695 = vpop.f32.mrf.mxu0
        %v696 = vadd.f32 0.0, %v695
        %697 = vmatmul.f32.gmra.mxu0 %v630
        %v698 = vpop.f32.mrf.mxu0
        %v699 = vadd.f32 0.0, %v698
        %700 = vdwg.mxu0
        %v701 = vmax.f32 %v654, 0.0
        %v702 = vmax.f32 %v657, 0.0
        %v703 = vmax.f32 %v660, 0.0
        %v704 = vmax.f32 %v663, 0.0
        %v705 = vmax.f32 %v666, 0.0
        %v706 = vmax.f32 %v669, 0.0
        %v707 = vmax.f32 %v672, 0.0
        %v708 = vmax.f32 %v675, 0.0
        %v709 = vmax.f32 %v678, 0.0
        %v710 = vmax.f32 %v681, 0.0
        %v711 = vmax.f32 %v684, 0.0
        %v712 = vmax.f32 %v687, 0.0
        %v713 = vmax.f32 %v690, 0.0
        %v714 = vmax.f32 %v693, 0.0
        %v715 = vmax.f32 %v696, 0.0
        %v716 = vmax.f32 %v699, 0.0
        %v717 = vadd.f32 %v701, %v702
        %v718 = vadd.f32 %v717, %v703
        %v719 = vadd.f32 %v718, %v704
        %v720 = vadd.f32 %v719, %v705
        %v721 = vadd.f32 %v720, %v706
        %v722 = vadd.f32 %v721, %v707
        %v723 = vadd.f32 %v722, %v708
        %v724 = vadd.f32 %v723, %v709
        %v725 = vadd.f32 %v724, %v710
        %v726 = vadd.f32 %v725, %v711
        %v727 = vadd.f32 %v726, %v712
        %v728 = vadd.f32 %v727, %v713
        %v729 = vadd.f32 %v728, %v714
        %v730 = vadd.f32 %v729, %v715
        %v731 = vadd.f32 %v730, %v716
        %v732 = vrot.slane %v731, 4
        %v733 = vadd.f32 %v731, %v732
        %v734 = vrot.slane %v733, 2
        %v735 = vadd.f32 %v733, %v734
        %v736 = vrot.slane %v735, 1
        %v737 = vadd.f32 %v735, %v736
        %s738 = scalar_lea.vmem %s501, 2 [#allocation3]
        %v739 = vld [vmem:[%s738] sm:$0x3]
        %v740 = vunpack.c.l.bf16 %v739
        %741 = vxpose.xlu0.b32.start [1/16] %v740, 128
        %742 = vxpose.xlu0.b32.cont [2/16] 0.0, 128
        %743 = vxpose.xlu0.b32.cont [3/16] 0.0, 128
        %744 = vxpose.xlu0.b32.cont [4/16] 0.0, 128
        %745 = vxpose.xlu0.b32.cont [5/16] 0.0, 128
        %746 = vxpose.xlu0.b32.cont [6/16] 0.0, 128
        %747 = vxpose.xlu0.b32.cont [7/16] 0.0, 128
        %748 = vxpose.xlu0.b32.cont [8/16] 0.0, 128
        %749 = vxpose.xlu0.b32.cont [9/16] 0.0, 128
        %750 = vxpose.xlu0.b32.cont [10/16] 0.0, 128
        %751 = vxpose.xlu0.b32.cont [11/16] 0.0, 128
        %752 = vxpose.xlu0.b32.cont [12/16] 0.0, 128
        %753 = vxpose.xlu0.b32.cont [13/16] 0.0, 128
        %754 = vxpose.xlu0.b32.cont [14/16] 0.0, 128
        %755 = vxpose.xlu0.b32.cont [15/16] 0.0, 128
        %756 = vxpose.xlu0.b32.end [16/16] 0.0, 128
        %v757 = vpop.trf.xlu0
        %v758 = vpop.trf.xlu0
        %v759 = vpop.trf.xlu0
        %v760 = vpop.trf.xlu0
        %v761 = vpop.trf.xlu0
        %v762 = vpop.trf.xlu0
        %v763 = vpop.trf.xlu0
        %v764 = vpop.trf.xlu0
        %v765 = vpop.trf.xlu0
        %v766 = vpop.trf.xlu0
        %v767 = vpop.trf.xlu0
        %v768 = vpop.trf.xlu0
        %v769 = vpop.trf.xlu0
        %v770 = vpop.trf.xlu0
        %v771 = vpop.trf.xlu0
        %v772 = vpop.trf.xlu0
        %v774 = vsel %vm583, %v757, 0
        %v777 = vsel %vm583, %v758, 0
        %v780 = vsel %vm583, %v759, 0
        %v783 = vsel %vm583, %v760, 0
        %v786 = vsel %vm583, %v761, 0
        %v789 = vsel %vm583, %v762, 0
        %v792 = vsel %vm583, %v763, 0
        %v795 = vsel %vm583, %v764, 0
        %v798 = vsel %vm583, %v765, 0
        %v801 = vsel %vm583, %v766, 0
        %v804 = vsel %vm583, %v767, 0
        %v807 = vsel %vm583, %v768, 0
        %v810 = vsel %vm583, %v769, 0
        %v813 = vsel %vm583, %v770, 0
        %v816 = vsel %vm583, %v771, 0
        %v819 = vsel %vm583, %v772, 0
        %821 = vmatpush.msra.mxu0 0.0
        %822 = vmatpush.msra.mxu0 0.0
        %823 = vmatpush.msra.mxu0 0.0
        %824 = vmatpush.msra.mxu0 0.0
        %825 = vmatpush.msra.mxu0 0.0
        %826 = vmatpush.msra.mxu0 0.0
        %827 = vmatpush.msra.mxu0 0.0
        %828 = vmatpush.msra.mxu0 0.0
        %829 = vmatpush.msra.mxu0 0.0
        %830 = vmatpush.msra.mxu0 0.0
        %831 = vmatpush.msra.mxu0 0.0
        %832 = vmatpush.msra.mxu0 0.0
        %833 = vmatpush.msra.mxu0 0.0
        %834 = vmatpush.msra.mxu0 0.0
        %835 = vmatpush.msra.mxu0 0.0
        %836 = vmatpush.msra.mxu0 %v634
        %837 = vmatmul.f32.gmra.mxu0 %v774
        %v838 = vpop.f32.mrf.mxu0
        %v839 = vadd.f32 0.0, %v838
        %840 = vmatmul.f32.gmra.mxu0 %v777
        %v841 = vpop.f32.mrf.mxu0
        %v842 = vadd.f32 0.0, %v841
        %843 = vmatmul.f32.gmra.mxu0 %v780
        %v844 = vpop.f32.mrf.mxu0
        %v845 = vadd.f32 0.0, %v844
        %846 = vmatmul.f32.gmra.mxu0 %v783
        %v847 = vpop.f32.mrf.mxu0
        %v848 = vadd.f32 0.0, %v847
        %849 = vmatmul.f32.gmra.mxu0 %v786
        %v850 = vpop.f32.mrf.mxu0
        %v851 = vadd.f32 0.0, %v850
        %852 = vmatmul.f32.gmra.mxu0 %v789
        %v853 = vpop.f32.mrf.mxu0
        %v854 = vadd.f32 0.0, %v853
        %855 = vmatmul.f32.gmra.mxu0 %v792
        %v856 = vpop.f32.mrf.mxu0
        %v857 = vadd.f32 0.0, %v856
        %858 = vmatmul.f32.gmra.mxu0 %v795
        %v859 = vpop.f32.mrf.mxu0
        %v860 = vadd.f32 0.0, %v859
        %861 = vmatmul.f32.gmra.mxu0 %v798
        %v862 = vpop.f32.mrf.mxu0
        %v863 = vadd.f32 0.0, %v862
        %864 = vmatmul.f32.gmra.mxu0 %v801
        %v865 = vpop.f32.mrf.mxu0
        %v866 = vadd.f32 0.0, %v865
        %867 = vmatmul.f32.gmra.mxu0 %v804
        %v868 = vpop.f32.mrf.mxu0
        %v869 = vadd.f32 0.0, %v868
        %870 = vmatmul.f32.gmra.mxu0 %v807
        %v871 = vpop.f32.mrf.mxu0
        %v872 = vadd.f32 0.0, %v871
        %873 = vmatmul.f32.gmra.mxu0 %v810
        %v874 = vpop.f32.mrf.mxu0
        %v875 = vadd.f32 0.0, %v874
        %876 = vmatmul.f32.gmra.mxu0 %v813
        %v877 = vpop.f32.mrf.mxu0
        %v878 = vadd.f32 0.0, %v877
        %879 = vmatmul.f32.gmra.mxu0 %v816
        %v880 = vpop.f32.mrf.mxu0
        %v881 = vadd.f32 0.0, %v880
        %882 = vmatmul.f32.gmra.mxu0 %v819
        %v883 = vpop.f32.mrf.mxu0
        %v884 = vadd.f32 0.0, %v883
        %885 = vdwg.mxu0
        %v886 = vmax.f32 %v839, 0.0
        %v887 = vmax.f32 %v842, 0.0
        %v888 = vmax.f32 %v845, 0.0
        %v889 = vmax.f32 %v848, 0.0
        %v890 = vmax.f32 %v851, 0.0
        %v891 = vmax.f32 %v854, 0.0
        %v892 = vmax.f32 %v857, 0.0
        %v893 = vmax.f32 %v860, 0.0
        %v894 = vmax.f32 %v863, 0.0
        %v895 = vmax.f32 %v866, 0.0
        %v896 = vmax.f32 %v869, 0.0
        %v897 = vmax.f32 %v872, 0.0
        %v898 = vmax.f32 %v875, 0.0
        %v899 = vmax.f32 %v878, 0.0
        %v900 = vmax.f32 %v881, 0.0
        %v901 = vmax.f32 %v884, 0.0
        %v902 = vadd.f32 %v886, %v887
        %v903 = vadd.f32 %v902, %v888
        %v904 = vadd.f32 %v903, %v889
        %v905 = vadd.f32 %v904, %v890
        %v906 = vadd.f32 %v905, %v891
        %v907 = vadd.f32 %v906, %v892
        %v908 = vadd.f32 %v907, %v893
        %v909 = vadd.f32 %v908, %v894
        %v910 = vadd.f32 %v909, %v895
        %v911 = vadd.f32 %v910, %v896
        %v912 = vadd.f32 %v911, %v897
        %v913 = vadd.f32 %v912, %v898
        %v914 = vadd.f32 %v913, %v899
        %v915 = vadd.f32 %v914, %v900
        %v916 = vadd.f32 %v915, %v901
        %v917 = vrot.slane %v916, 4
        %v918 = vadd.f32 %v916, %v917
        %v919 = vrot.slane %v918, 2
        %v920 = vadd.f32 %v918, %v919
        %v921 = vrot.slane %v920, 1
        %v922 = vadd.f32 %v920, %v921
        %v923 = vld [vmem:[#allocation2] sm:$0x3]
        %vm924 = vcmask 1040384
        %v925 = vsel %vm924, %v737, %v922
        %v926 = vadd.f32 %v923, %v925
        %927 = vst [vmem:[#allocation2] sm:$0x3] %v926
        %p928 = scmp.eq.s32.totalorder %s30, 1
        // Predicated region
        $region115: #{simsiam_forward.1} parent=105 // pred_check
          %p929 = pneg %p928
        $region116: #{simsiam_forward.1} parent=105 // pred_check_branch
          %931 = sbr.rel (%p929) target = $region118
        $region117: #{simsiam_forward.1} parent=105 // pred_region
          %v932 = vld [vmem:[#allocation2] sm:$0x3]
          %v933 = vmul.f32 %v932, 0.00390625
          %934 = vst [vmem:[#allocation4] sm:$0x3] %v933
          %v935 = vpack.c.bf16 %v933, %v933
          %v936 = vld [vmem:[%s2] sm:$0xff]
          %v937 = vld [vmem:[%s2 + $0x8] sm:$0xff]
          %v938 = vld [vmem:[%s2 + $0x10] sm:$0xff]
          %v939 = vld [vmem:[%s2 + $0x18] sm:$0xff]
          %v940 = vld [vmem:[%s2 + $0x20] sm:$0xff]
          %v941 = vld [vmem:[%s2 + $0x28] sm:$0xff]
          %v942 = vld [vmem:[%s2 + $0x30] sm:$0xff]
          %v943 = vld [vmem:[%s2 + $0x38] sm:$0xff]
          %v944 = vld [vmem:[%s2 + $0x40] sm:$0xff]
          %v945 = vld [vmem:[%s2 + $0x48] sm:$0xff]
          %v946 = vld [vmem:[%s2 + $0x50] sm:$0xff]
          %v947 = vld [vmem:[%s2 + $0x58] sm:$0xff]
          %v948 = vld [vmem:[%s2 + $0x60] sm:$0xff]
          %v949 = vld [vmem:[%s2 + $0x68] sm:$0xff]
          %v950 = vld [vmem:[%s2 + $0x70] sm:$0xff]
          %v951 = vld [vmem:[%s2 + $0x78] sm:$0xff]
          %v952 = vld [vmem:[%s2 + $0x80] sm:$0xff]
          %v953 = vld [vmem:[%s2 + $0x88] sm:$0xff]
          %v954 = vld [vmem:[%s2 + $0x90] sm:$0xff]
          %v955 = vld [vmem:[%s2 + $0x98] sm:$0xff]
          %v956 = vld [vmem:[%s2 + $0xa0] sm:$0xff]
          %v957 = vld [vmem:[%s2 + $0xa8] sm:$0xff]
          %v958 = vld [vmem:[%s2 + $0xb0] sm:$0xff]
          %v959 = vld [vmem:[%s2 + $0xb8] sm:$0xff]
          %v960 = vld [vmem:[%s2 + $0xc0] sm:$0xff]
          %v961 = vld [vmem:[%s2 + $0xc8] sm:$0xff]
          %v962 = vld [vmem:[%s2 + $0xd0] sm:$0xff]
          %v963 = vld [vmem:[%s2 + $0xd8] sm:$0xff]
          %v964 = vld [vmem:[%s2 + $0xe0] sm:$0xff]
          %v965 = vld [vmem:[%s2 + $0xe8] sm:$0xff]
          %v966 = vld [vmem:[%s2 + $0xf0] sm:$0xff]
          %v967 = vld [vmem:[%s2 + $0xf8] sm:$0xff]
          %v1000 = vunpack.c.l.b16 %v936
          %v1001 = vunpack.c.h.b16 %v936
          %v1002 = vunpack.c.l.b16 %v937
          %v1003 = vunpack.c.h.b16 %v937
          %v1004 = vunpack.c.l.b16 %v938
          %v1005 = vunpack.c.h.b16 %v938
          %v1006 = vunpack.c.l.b16 %v939
          %v1007 = vunpack.c.h.b16 %v939
          %v1008 = vunpack.c.l.b16 %v940
          %v1009 = vunpack.c.h.b16 %v940
          %v1010 = vunpack.c.l.b16 %v941
          %v1011 = vunpack.c.h.b16 %v941
          %v1012 = vunpack.c.l.b16 %v942
          %v1013 = vunpack.c.h.b16 %v942
          %v1014 = vunpack.c.l.b16 %v943
          %v1015 = vunpack.c.h.b16 %v943
          %v1016 = vunpack.c.l.b16 %v944
          %v1017 = vunpack.c.h.b16 %v944
          %v1018 = vunpack.c.l.b16 %v945
          %v1019 = vunpack.c.h.b16 %v945
          %v1020 = vunpack.c.l.b16 %v946
          %v1021 = vunpack.c.h.b16 %v946
          %v1022 = vunpack.c.l.b16 %v947
          %v1023 = vunpack.c.h.b16 %v947
          %v1024 = vunpack.c.l.b16 %v948
          %v1025 = vunpack.c.h.b16 %v948
          %v1026 = vunpack.c.l.b16 %v949
          %v1027 = vunpack.c.h.b16 %v949
          %v1028 = vunpack.c.l.b16 %v950
          %v1029 = vunpack.c.h.b16 %v950
          %v1030 = vunpack.c.l.b16 %v951
          %v1031 = vunpack.c.h.b16 %v951
          %v1032 = vunpack.c.l.b16 %v952
          %v1033 = vunpack.c.h.b16 %v952
          %v1034 = vunpack.c.l.b16 %v953
          %v1035 = vunpack.c.h.b16 %v953
          %v1036 = vunpack.c.l.b16 %v954
          %v1037 = vunpack.c.h.b16 %v954
          %v1038 = vunpack.c.l.b16 %v955
          %v1039 = vunpack.c.h.b16 %v955
          %v1040 = vunpack.c.l.b16 %v956
          %v1041 = vunpack.c.h.b16 %v956
          %v1042 = vunpack.c.l.b16 %v957
          %v1043 = vunpack.c.h.b16 %v957
          %v1044 = vunpack.c.l.b16 %v958
          %v1045 = vunpack.c.h.b16 %v958
          %v1046 = vunpack.c.l.b16 %v959
          %v1047 = vunpack.c.h.b16 %v959
          %v1048 = vunpack.c.l.b16 %v960
          %v1049 = vunpack.c.h.b16 %v960
          %v1050 = vunpack.c.l.b16 %v961
          %v1051 = vunpack.c.h.b16 %v961
          %v1052 = vunpack.c.l.b16 %v962
          %v1053 = vunpack.c.h.b16 %v962
          %v1054 = vunpack.c.l.b16 %v963
          %v1055 = vunpack.c.h.b16 %v963
          %v1056 = vunpack.c.l.b16 %v964
          %v1057 = vunpack.c.h.b16 %v964
          %v1058 = vunpack.c.l.b16 %v965
          %v1059 = vunpack.c.h.b16 %v965
          %v1060 = vunpack.c.l.b16 %v966
          %v1061 = vunpack.c.h.b16 %v966
          %v1062 = vunpack.c.l.b16 %v967
          %v1063 = vunpack.c.h.b16 %v967
          %v1064 = vpack.c.b16 %v1004, %v1000
          %v1065 = vpack.c.b16 %v1005, %v1001
          %v1066 = vpack.c.b16 %v1006, %v1002
          %v1067 = vpack.c.b16 %v1007, %v1003
          %v1068 = vpack.c.b16 %v1012, %v1008
          %v1069 = vpack.c.b16 %v1013, %v1009
          %v1070 = vpack.c.b16 %v1014, %v1010
          %v1071 = vpack.c.b16 %v1015, %v1011
          %v1072 = vpack.c.b16 %v1020, %v1016
          %v1073 = vpack.c.b16 %v1021, %v1017
          %v1074 = vpack.c.b16 %v1022, %v1018
          %v1075 = vpack.c.b16 %v1023, %v1019
          %v1076 = vpack.c.b16 %v1028, %v1024
          %v1077 = vpack.c.b16 %v1029, %v1025
          %v1078 = vpack.c.b16 %v1030, %v1026
          %v1079 = vpack.c.b16 %v1031, %v1027
          %v1080 = vpack.c.b16 %v1036, %v1032
          %v1081 = vpack.c.b16 %v1037, %v1033
          %v1082 = vpack.c.b16 %v1038, %v1034
          %v1083 = vpack.c.b16 %v1039, %v1035
          %v1084 = vpack.c.b16 %v1044, %v1040
          %v1085 = vpack.c.b16 %v1045, %v1041
          %v1086 = vpack.c.b16 %v1046, %v1042
          %v1087 = vpack.c.b16 %v1047, %v1043
          %v1088 = vpack.c.b16 %v1052, %v1048
          %v1089 = vpack.c.b16 %v1053, %v1049
          %v1090 = vpack.c.b16 %v1054, %v1050
          %v1091 = vpack.c.b16 %v1055, %v1051
          %v1092 = vpack.c.b16 %v1060, %v1056
          %v1093 = vpack.c.b16 %v1061, %v1057
          %v1094 = vpack.c.b16 %v1062, %v1058
          %v1095 = vpack.c.b16 %v1063, %v1059
          %1128 = vmatpush.bf16.msra.mxu0 %v1092
          %1129 = vmatpush.bf16.msra.mxu0 %v1088
          %1130 = vmatpush.bf16.msra.mxu0 %v1084
          %1131 = vmatpush.bf16.msra.mxu0 %v1080
          %1132 = vmatpush.bf16.msra.mxu0 %v1076
          %1133 = vmatpush.bf16.msra.mxu0 %v1072
          %1134 = vmatpush.bf16.msra.mxu0 %v1068
          %1135 = vmatpush.bf16.msra.mxu0 %v1064
          %1136 = vmatmul.bf16.gmra.mxu0 %v935
          %v1137 = vpop.f32.mrf.mxu0
          %v1138 = vadd.f32 0.0, %v1137
          %v1139 = vpop.f32.mrf.mxu0
          %1140 = vdwg.mxu0
          %1141 = vmatpush.bf16.msra.mxu0 %v1093
          %1142 = vmatpush.bf16.msra.mxu0 %v1089
          %1143 = vmatpush.bf16.msra.mxu0 %v1085
          %1144 = vmatpush.bf16.msra.mxu0 %v1081
          %1145 = vmatpush.bf16.msra.mxu0 %v1077
          %1146 = vmatpush.bf16.msra.mxu0 %v1073
          %1147 = vmatpush.bf16.msra.mxu0 %v1069
          %1148 = vmatpush.bf16.msra.mxu0 %v1065
          %1149 = vmatmul.bf16.gmra.mxu0 %v935
          %v1150 = vpop.f32.mrf.mxu0
          %v1151 = vadd.f32 0.0, %v1150
          %v1152 = vpop.f32.mrf.mxu0
          %1153 = vdwg.mxu0
          %1154 = vmatpush.bf16.msra.mxu0 %v1094
          %1155 = vmatpush.bf16.msra.mxu0 %v1090
          %1156 = vmatpush.bf16.msra.mxu0 %v1086
          %1157 = vmatpush.bf16.msra.mxu0 %v1082
          %1158 = vmatpush.bf16.msra.mxu0 %v1078
          %1159 = vmatpush.bf16.msra.mxu0 %v1074
          %1160 = vmatpush.bf16.msra.mxu0 %v1070
          %1161 = vmatpush.bf16.msra.mxu0 %v1066
          %1162 = vmatmul.bf16.gmra.mxu0 %v935
          %v1163 = vpop.f32.mrf.mxu0
          %v1164 = vadd.f32 0.0, %v1163
          %v1165 = vpop.f32.mrf.mxu0
          %1166 = vdwg.mxu0
          %1167 = vmatpush.bf16.msra.mxu0 %v1095
          %1168 = vmatpush.bf16.msra.mxu0 %v1091
          %1169 = vmatpush.bf16.msra.mxu0 %v1087
          %1170 = vmatpush.bf16.msra.mxu0 %v1083
          %1171 = vmatpush.bf16.msra.mxu0 %v1079
          %1172 = vmatpush.bf16.msra.mxu0 %v1075
          %1173 = vmatpush.bf16.msra.mxu0 %v1071
          %1174 = vmatpush.bf16.msra.mxu0 %v1067
          %1175 = vmatmul.bf16.gmra.mxu0 %v935
          %v1176 = vpop.f32.mrf.mxu0
          %v1177 = vadd.f32 0.0, %v1176
          %v1178 = vpop.f32.mrf.mxu0
          %1179 = vdwg.mxu0
          %v1180 = vld [vmem:[%s3] sm:$0xf]
          %v1181 = vld [vmem:[%s4] sm:$0xf]
          %vm1182 = vcmask 1041408
          %v1183 = vsel %vm1182, %v1138, 0.0
          %v1184 = vrot.slane %v1183, 4
          %v1185 = vadd.f32 %v1183, %v1184
          %v1186 = vrot.slane %v1185, 2
          %v1187 = vadd.f32 %v1185, %v1186
          %v1188 = vrot.slane %v1187, 1
          %v1189 = vadd.f32 %v1187, %v1188
          %v1190 = vsel %vm1182, %v1151, 0.0
          %v1191 = vrot.slane %v1190, 4
          %v1192 = vadd.f32 %v1190, %v1191
          %v1193 = vrot.slane %v1192, 2
          %v1194 = vadd.f32 %v1192, %v1193
          %v1195 = vrot.slane %v1194, 1
          %v1196 = vadd.f32 %v1194, %v1195
          %v1197 = vsel %vm1182, %v1164, 0.0
          %v1198 = vrot.slane %v1197, 4
          %v1199 = vadd.f32 %v1197, %v1198
          %v1200 = vrot.slane %v1199, 2
          %v1201 = vadd.f32 %v1199, %v1200
          %v1202 = vrot.slane %v1201, 1
          %v1203 = vadd.f32 %v1201, %v1202
          %v1204 = vsel %vm1182, %v1177, 0.0
          %v1205 = vrot.slane %v1204, 4
          %v1206 = vadd.f32 %v1204, %v1205
          %v1207 = vrot.slane %v1206, 2
          %v1208 = vadd.f32 %v1206, %v1207
          %v1209 = vrot.slane %v1208, 1
          %v1210 = vadd.f32 %v1208, %v1209
          %v1211 = vrcp.pop 2.0
          %v1212 = vmul.f32 2.0, %v1211
          %v1213 = vsub.f32 1.0, %v1212
          %v1214 = vmul.f32 %v1211, %v1213
          %v1215 = vadd.f32 %v1211, %v1214
          %vm1216 = vweird.f32 %v1211
          %v1217 = vsel %vm1216, %v1211, %v1215
          %v1218 = vmul.f32 %v1189, %v1217
          %v1219 = vmul.f32 %v1196, %v1217
          %v1220 = vmul.f32 %v1203, %v1217
          %v1221 = vmul.f32 %v1210, %v1217
          %v1222 = vsub.f32 %v1138, %v1218
          %v1223 = vsub.f32 %v1151, %v1219
          %v1224 = vsub.f32 %v1164, %v1220
          %v1225 = vsub.f32 %v1177, %v1221
          %v1226 = vmul.f32 %v1222, %v1222
          %v1227 = vmul.f32 %v1223, %v1223
          %v1228 = vmul.f32 %v1224, %v1224
          %v1229 = vmul.f32 %v1225, %v1225
          %v1230 = vsel %vm1182, %v1226, 0.0
          %v1231 = vrot.slane %v1230, 4
          %v1232 = vadd.f32 %v1230, %v1231
          %v1233 = vrot.slane %v1232, 2
          %v1234 = vadd.f32 %v1232, %v1233
          %v1235 = vrot.slane %v1234, 1
          %v1236 = vadd.f32 %v1234, %v1235
          %v1237 = vsel %vm1182, %v1227, 0.0
          %v1238 = vrot.slane %v1237, 4
          %v1239 = vadd.f32 %v1237, %v1238
          %v1240 = vrot.slane %v1239, 2
          %v1241 = vadd.f32 %v1239, %v1240
          %v1242 = vrot.slane %v1241, 1
          %v1243 = vadd.f32 %v1241, %v1242
          %v1244 = vsel %vm1182, %v1228, 0.0
          %v1245 = vrot.slane %v1244, 4
          %v1246 = vadd.f32 %v1244, %v1245
          %v1247 = vrot.slane %v1246, 2
          %v1248 = vadd.f32 %v1246, %v1247
          %v1249 = vrot.slane %v1248, 1
          %v1250 = vadd.f32 %v1248, %v1249
          %v1251 = vsel %vm1182, %v1229, 0.0
          %v1252 = vrot.slane %v1251, 4
          %v1253 = vadd.f32 %v1251, %v1252
          %v1254 = vrot.slane %v1253, 2
          %v1255 = vadd.f32 %v1253, %v1254
          %v1256 = vrot.slane %v1255, 1
          %v1257 = vadd.f32 %v1255, %v1256
          %v1258 = vmul.f32 %v1236, %v1217
          %v1259 = vmul.f32 %v1243, %v1217
          %v1260 = vmul.f32 %v1250, %v1217
          %v1261 = vmul.f32 %v1257, %v1217
          %v1262 = vadd.f32 %v1258, 1e-05
          %v1263 = vadd.f32 %v1259, 1e-05
          %v1264 = vadd.f32 %v1260, 1e-05
          %v1265 = vadd.f32 %v1261, 1e-05
          %v1266 = vrsqrt.pop %v1262
          %v1267 = vmul.f32 %v1266, %v1262
          %v1268 = vmul.f32 %v1267, %v1266
          %v1269 = vmul.f32 0.5, %v1268
          %v1270 = vsub.f32 1.5, %v1269
          %v1271 = vmul.f32 %v1266, %v1270
          %vm1272 = vweird.f32 %v1262
          %vm1273 = vweird.f32 %v1266
          %vm1274 = vmor %vm1272, %vm1273
          %v1275 = vsel %vm1274, %v1266, %v1271
          %v1276 = vrsqrt.pop %v1263
          %v1277 = vmul.f32 %v1276, %v1263
          %v1278 = vmul.f32 %v1277, %v1276
          %v1279 = vmul.f32 0.5, %v1278
          %v1280 = vsub.f32 1.5, %v1279
          %v1281 = vmul.f32 %v1276, %v1280
          %vm1282 = vweird.f32 %v1263
          %vm1283 = vweird.f32 %v1276
          %vm1284 = vmor %vm1282, %vm1283
          %v1285 = vsel %vm1284, %v1276, %v1281
          %v1286 = vrsqrt.pop %v1264
          %v1287 = vmul.f32 %v1286, %v1264
          %v1288 = vmul.f32 %v1287, %v1286
          %v1289 = vmul.f32 0.5, %v1288
          %v1290 = vsub.f32 1.5, %v1289
          %v1291 = vmul.f32 %v1286, %v1290
          %vm1292 = vweird.f32 %v1264
          %vm1293 = vweird.f32 %v1286
          %vm1294 = vmor %vm1292, %vm1293
          %v1295 = vsel %vm1294, %v1286, %v1291
          %v1296 = vrsqrt.pop %v1265
          %v1297 = vmul.f32 %v1296, %v1265
          %v1298 = vmul.f32 %v1297, %v1296
          %v1299 = vmul.f32 0.5, %v1298
          %v1300 = vsub.f32 1.5, %v1299
          %v1301 = vmul.f32 %v1296, %v1300
          %vm1302 = vweird.f32 %v1265
          %vm1303 = vweird.f32 %v1296
          %vm1304 = vmor %vm1302, %vm1303
          %v1305 = vsel %vm1304, %v1296, %v1301
          %v1306 = vmul.f32 %v1222, %v1275
          %v1307 = vmul.f32 %v1223, %v1285
          %v1308 = vmul.f32 %v1224, %v1295
          %v1309 = vmul.f32 %v1225, %v1305
          %v1311 = vperm.slane %v1180, 0
          %v1312 = vperm.slane %v1180, 1
          %v1313 = vperm.slane %v1180, 2
          %v1314 = vperm.slane %v1180, 3
          %v1319 = vmul.f32 %v1306, %v1311
          %v1320 = vmul.f32 %v1307, %v1312
          %v1321 = vmul.f32 %v1308, %v1313
          %v1322 = vmul.f32 %v1309, %v1314
          %v1324 = vperm.slane %v1181, 0
          %v1325 = vperm.slane %v1181, 1
          %v1326 = vperm.slane %v1181, 2
          %v1327 = vperm.slane %v1181, 3
          %v1332 = vadd.f32 %v1319, %v1324
          %v1333 = vadd.f32 %v1320, %v1325
          %v1334 = vadd.f32 %v1321, %v1326
          %v1335 = vadd.f32 %v1322, %v1327
          %v1336 = vmax.f32 %v1332, 0.0
          %v1337 = vmax.f32 %v1333, 0.0
          %v1338 = vmax.f32 %v1334, 0.0
          %v1339 = vmax.f32 %v1335, 0.0
          %v1340 = vpack.c.bf16 %v1336, %v1336
          %v1341 = vpack.c.bf16 %v1337, %v1337
          %v1342 = vpack.c.bf16 %v1338, %v1338
          %v1343 = vpack.c.bf16 %v1339, %v1339
          %v1344 = vld [vmem:[%s5] sm:$0xff]
          %v1345 = vld [vmem:[%s5 + $0x8] sm:$0xff]
          %v1346 = vld [vmem:[%s5 + $0x10] sm:$0xff]
          %v1347 = vld [vmem:[%s5 + $0x18] sm:$0xff]
          %v1348 = vld [vmem:[%s5 + $0x20] sm:$0xff]
          %v1349 = vld [vmem:[%s5 + $0x28] sm:$0xff]
          %v1350 = vld [vmem:[%s5 + $0x30] sm:$0xff]
          %v1351 = vld [vmem:[%s5 + $0x38] sm:$0xff]
          %v1352 = vld [vmem:[%s5 + $0x40] sm:$0xff]
          %v1353 = vld [vmem:[%s5 + $0x48] sm:$0xff]
          %v1354 = vld [vmem:[%s5 + $0x50] sm:$0xff]
          %v1355 = vld [vmem:[%s5 + $0x58] sm:$0xff]
          %v1356 = vld [vmem:[%s5 + $0x60] sm:$0xff]
          %v1357 = vld [vmem:[%s5 + $0x68] sm:$0xff]
          %v1358 = vld [vmem:[%s5 + $0x70] sm:$0xff]
          %v1359 = vld [vmem:[%s5 + $0x78] sm:$0xff]
          %v1360 = vld [vmem:[%s5 + $0x80] sm:$0xff]
          %v1361 = vld [vmem:[%s5 + $0x88] sm:$0xff]
          %v1362 = vld [vmem:[%s5 + $0x90] sm:$0xff]
          %v1363 = vld [vmem:[%s5 + $0x98] sm:$0xff]
          %v1364 = vld [vmem:[%s5 + $0xa0] sm:$0xff]
          %v1365 = vld [vmem:[%s5 + $0xa8] sm:$0xff]
          %v1366 = vld [vmem:[%s5 + $0xb0] sm:$0xff]
          %v1367 = vld [vmem:[%s5 + $0xb8] sm:$0xff]
          %v1368 = vld [vmem:[%s5 + $0xc0] sm:$0xff]
          %v1369 = vld [vmem:[%s5 + $0xc8] sm:$0xff]
          %v1370 = vld [vmem:[%s5 + $0xd0] sm:$0xff]
          %v1371 = vld [vmem:[%s5 + $0xd8] sm:$0xff]
          %v1372 = vld [vmem:[%s5 + $0xe0] sm:$0xff]
          %v1373 = vld [vmem:[%s5 + $0xe8] sm:$0xff]
          %v1374 = vld [vmem:[%s5 + $0xf0] sm:$0xff]
          %v1375 = vld [vmem:[%s5 + $0xf8] sm:$0xff]
          %v1376 = vld [vmem:[%s5 + $0x100] sm:$0xff]
          %v1377 = vld [vmem:[%s5 + $0x108] sm:$0xff]
          %v1378 = vld [vmem:[%s5 + $0x110] sm:$0xff]
          %v1379 = vld [vmem:[%s5 + $0x118] sm:$0xff]
          %v1380 = vld [vmem:[%s5 + $0x120] sm:$0xff]
          %v1381 = vld [vmem:[%s5 + $0x128] sm:$0xff]
          %v1382 = vld [vmem:[%s5 + $0x130] sm:$0xff]
          %v1383 = vld [vmem:[%s5 + $0x138] sm:$0xff]
          %v1384 = vld [vmem:[%s5 + $0x140] sm:$0xff]
          %v1385 = vld [vmem:[%s5 + $0x148] sm:$0xff]
          %v1386 = vld [vmem:[%s5 + $0x150] sm:$0xff]
          %v1387 = vld [vmem:[%s5 + $0x158] sm:$0xff]
          %v1388 = vld [vmem:[%s5 + $0x160] sm:$0xff]
          %v1389 = vld [vmem:[%s5 + $0x168] sm:$0xff]
          %v1390 = vld [vmem:[%s5 + $0x170] sm:$0xff]
          %v1391 = vld [vmem:[%s5 + $0x178] sm:$0xff]
          %v1392 = vld [vmem:[%s5 + $0x180] sm:$0xff]
          %v1393 = vld [vmem:[%s5 + $0x188] sm:$0xff]
          %v1394 = vld [vmem:[%s5 + $0x190] sm:$0xff]
          %v1395 = vld [vmem:[%s5 + $0x198] sm:$0xff]
          %v1396 = vld [vmem:[%s5 + $0x1a0] sm:$0xff]
          %v1397 = vld [vmem:[%s5 + $0x1a8] sm:$0xff]
          %v1398 = vld [vmem:[%s5 + $0x1b0] sm:$0xff]
          %v1399 = vld [vmem:[%s5 + $0x1b8] sm:$0xff]
          %v1400 = vld [vmem:[%s5 + $0x1c0] sm:$0xff]
          %v1401 = vld [vmem:[%s5 + $0x1c8] sm:$0xff]
          %v1402 = vld [vmem:[%s5 + $0x1d0] sm:$0xff]
          %v1403 = vld [vmem:[%s5 + $0x1d8] sm:$0xff]
          %v1404 = vld [vmem:[%s5 + $0x1e0] sm:$0xff]
          %v1405 = vld [vmem:[%s5 + $0x1e8] sm:$0xff]
          %v1406 = vld [vmem:[%s5 + $0x1f0] sm:$0xff]
          %v1407 = vld [vmem:[%s5 + $0x1f8] sm:$0xff]
          %v1408 = vld [vmem:[%s5 + $0x200] sm:$0xff]
          %v1409 = vld [vmem:[%s5 + $0x208] sm:$0xff]
          %v1410 = vld [vmem:[%s5 + $0x210] sm:$0xff]
          %v1411 = vld [vmem:[%s5 + $0x218] sm:$0xff]
          %v1412 = vld [vmem:[%s5 + $0x220] sm:$0xff]
          %v1413 = vld [vmem:[%s5 + $0x228] sm:$0xff]
          %v1414 = vld [vmem:[%s5 + $0x230] sm:$0xff]
          %v1415 = vld [vmem:[%s5 + $0x238] sm:$0xff]
          %v1416 = vld [vmem:[%s5 + $0x240] sm:$0xff]
          %v1417 = vld [vmem:[%s5 + $0x248] sm:$0xff]
          %v1418 = vld [vmem:[%s5 + $0x250] sm:$0xff]
          %v1419 = vld [vmem:[%s5 + $0x258] sm:$0xff]
          %v1420 = vld [vmem:[%s5 + $0x260] sm:$0xff]
          %v1421 = vld [vmem:[%s5 + $0x268] sm:$0xff]
          %v1422 = vld [vmem:[%s5 + $0x270] sm:$0xff]
          %v1423 = vld [vmem:[%s5 + $0x278] sm:$0xff]
          %v1424 = vld [vmem:[%s5 + $0x280] sm:$0xff]
          %v1425 = vld [vmem:[%s5 + $0x288] sm:$0xff]
          %v1426 = vld [vmem:[%s5 + $0x290] sm:$0xff]
          %v1427 = vld [vmem:[%s5 + $0x298] sm:$0xff]
          %v1428 = vld [vmem:[%s5 + $0x2a0] sm:$0xff]
          %v1429 = vld [vmem:[%s5 + $0x2a8] sm:$0xff]
          %v1430 = vld [vmem:[%s5 + $0x2b0] sm:$0xff]
          %v1431 = vld [vmem:[%s5 + $0x2b8] sm:$0xff]
          %v1432 = vld [vmem:[%s5 + $0x2c0] sm:$0xff]
          %v1433 = vld [vmem:[%s5 + $0x2c8] sm:$0xff]
          %v1434 = vld [vmem:[%s5 + $0x2d0] sm:$0xff]
          %v1435 = vld [vmem:[%s5 + $0x2d8] sm:$0xff]
          %v1436 = vld [vmem:[%s5 + $0x2e0] sm:$0xff]
          %v1437 = vld [vmem:[%s5 + $0x2e8] sm:$0xff]
          %v1438 = vld [vmem:[%s5 + $0x2f0] sm:$0xff]
          %v1439 = vld [vmem:[%s5 + $0x2f8] sm:$0xff]
          %v1440 = vld [vmem:[%s5 + $0x300] sm:$0xff]
          %v1441 = vld [vmem:[%s5 + $0x308] sm:$0xff]
          %v1442 = vld [vmem:[%s5 + $0x310] sm:$0xff]
          %v1443 = vld [vmem:[%s5 + $0x318] sm:$0xff]
          %v1444 = vld [vmem:[%s5 + $0x320] sm:$0xff]
          %v1445 = vld [vmem:[%s5 + $0x328] sm:$0xff]
          %v1446 = vld [vmem:[%s5 + $0x330] sm:$0xff]
          %v1447 = vld [vmem:[%s5 + $0x338] sm:$0xff]
          %v1448 = vld [vmem:[%s5 + $0x340] sm:$0xff]
          %v1449 = vld [vmem:[%s5 + $0x348] sm:$0xff]
          %v1450 = vld [vmem:[%s5 + $0x350] sm:$0xff]
          %v1451 = vld [vmem:[%s5 + $0x358] sm:$0xff]
          %v1452 = vld [vmem:[%s5 + $0x360] sm:$0xff]
          %v1453 = vld [vmem:[%s5 + $0x368] sm:$0xff]
          %v1454 = vld [vmem:[%s5 + $0x370] sm:$0xff]
          %v1455 = vld [vmem:[%s5 + $0x378] sm:$0xff]
          %v1456 = vld [vmem:[%s5 + $0x380] sm:$0xff]
          %v1457 = vld [vmem:[%s5 + $0x388] sm:$0xff]
          %v1458 = vld [vmem:[%s5 + $0x390] sm:$0xff]
          %v1459 = vld [vmem:[%s5 + $0x398] sm:$0xff]
          %v1460 = vld [vmem:[%s5 + $0x3a0] sm:$0xff]
          %v1461 = vld [vmem:[%s5 + $0x3a8] sm:$0xff]
          %v1462 = vld [vmem:[%s5 + $0x3b0] sm:$0xff]
          %v1463 = vld [vmem:[%s5 + $0x3b8] sm:$0xff]
          %v1464 = vld [vmem:[%s5 + $0x3c0] sm:$0xff]
          %v1465 = vld [vmem:[%s5 + $0x3c8] sm:$0xff]
          %v1466 = vld [vmem:[%s5 + $0x3d0] sm:$0xff]
          %v1467 = vld [vmem:[%s5 + $0x3d8] sm:$0xff]
          %v1468 = vld [vmem:[%s5 + $0x3e0] sm:$0xff]
          %v1469 = vld [vmem:[%s5 + $0x3e8] sm:$0xff]
          %v1470 = vld [vmem:[%s5 + $0x3f0] sm:$0xff]
          %v1471 = vld [vmem:[%s5 + $0x3f8] sm:$0xff]
          %v1600 = vunpack.c.l.b16 %v1344
          %v1601 = vunpack.c.h.b16 %v1344
          %v1602 = vunpack.c.l.b16 %v1345
          %v1603 = vunpack.c.h.b16 %v1345
          %v1604 = vunpack.c.l.b16 %v1346
          %v1605 = vunpack.c.h.b16 %v1346
          %v1606 = vunpack.c.l.b16 %v1347
          %v1607 = vunpack.c.h.b16 %v1347
          %v1608 = vunpack.c.l.b16 %v1348
          %v1609 = vunpack.c.h.b16 %v1348
          %v1610 = vunpack.c.l.b16 %v1349
          %v1611 = vunpack.c.h.b16 %v1349
          %v1612 = vunpack.c.l.b16 %v1350
          %v1613 = vunpack.c.h.b16 %v1350
          %v1614 = vunpack.c.l.b16 %v1351
          %v1615 = vunpack.c.h.b16 %v1351
          %v1616 = vunpack.c.l.b16 %v1352
          %v1617 = vunpack.c.h.b16 %v1352
          %v1618 = vunpack.c.l.b16 %v1353
          %v1619 = vunpack.c.h.b16 %v1353
          %v1620 = vunpack.c.l.b16 %v1354
          %v1621 = vunpack.c.h.b16 %v1354
          %v1622 = vunpack.c.l.b16 %v1355
          %v1623 = vunpack.c.h.b16 %v1355
          %v1624 = vunpack.c.l.b16 %v1356
          %v1625 = vunpack.c.h.b16 %v1356
          %v1626 = vunpack.c.l.b16 %v1357
          %v1627 = vunpack.c.h.b16 %v1357
          %v1628 = vunpack.c.l.b16 %v1358
          %v1629 = vunpack.c.h.b16 %v1358
          %v1630 = vunpack.c.l.b16 %v1359
          %v1631 = vunpack.c.h.b16 %v1359
          %v1632 = vunpack.c.l.b16 %v1360
          %v1633 = vunpack.c.h.b16 %v1360
          %v1634 = vunpack.c.l.b16 %v1361
          %v1635 = vunpack.c.h.b16 %v1361
          %v1636 = vunpack.c.l.b16 %v1362
          %v1637 = vunpack.c.h.b16 %v1362
          %v1638 = vunpack.c.l.b16 %v1363
          %v1639 = vunpack.c.h.b16 %v1363
          %v1640 = vunpack.c.l.b16 %v1364
          %v1641 = vunpack.c.h.b16 %v1364
          %v1642 = vunpack.c.l.b16 %v1365
          %v1643 = vunpack.c.h.b16 %v1365
          %v1644 = vunpack.c.l.b16 %v1366
          %v1645 = vunpack.c.h.b16 %v1366
          %v1646 = vunpack.c.l.b16 %v1367
          %v1647 = vunpack.c.h.b16 %v1367
          %v1648 = vunpack.c.l.b16 %v1368
          %v1649 = vunpack.c.h.b16 %v1368
          %v1650 = vunpack.c.l.b16 %v1369
          %v1651 = vunpack.c.h.b16 %v1369
          %v1652 = vunpack.c.l.b16 %v1370
          %v1653 = vunpack.c.h.b16 %v1370
          %v1654 = vunpack.c.l.b16 %v1371
          %v1655 = vunpack.c.h.b16 %v1371
          %v1656 = vunpack.c.l.b16 %v1372
          %v1657 = vunpack.c.h.b16 %v1372
          %v1658 = vunpack.c.l.b16 %v1373
          %v1659 = vunpack.c.h.b16 %v1373
          %v1660 = vunpack.c.l.b16 %v1374
          %v1661 = vunpack.c.h.b16 %v1374
          %v1662 = vunpack.c.l.b16 %v1375
          %v1663 = vunpack.c.h.b16 %v1375
          %v1664 = vunpack.c.l.b16 %v1376
          %v1665 = vunpack.c.h.b16 %v1376
          %v1666 = vunpack.c.l.b16 %v1377
          %v1667 = vunpack.c.h.b16 %v1377
          %v1668 = vunpack.c.l.b16 %v1378
          %v1669 = vunpack.c.h.b16 %v1378
          %v1670 = vunpack.c.l.b16 %v1379
          %v1671 = vunpack.c.h.b16 %v1379
          %v1672 = vunpack.c.l.b16 %v1380
          %v1673 = vunpack.c.h.b16 %v1380
          %v1674 = vunpack.c.l.b16 %v1381
          %v1675 = vunpack.c.h.b16 %v1381
          %v1676 = vunpack.c.l.b16 %v1382
          %v1677 = vunpack.c.h.b16 %v1382
          %v1678 = vunpack.c.l.b16 %v1383
          %v1679 = vunpack.c.h.b16 %v1383
          %v1680 = vunpack.c.l.b16 %v1384
          %v1681 = vunpack.c.h.b16 %v1384
          %v1682 = vunpack.c.l.b16 %v1385
          %v1683 = vunpack.c.h.b16 %v1385
          %v1684 = vunpack.c.l.b16 %v1386
          %v1685 = vunpack.c.h.b16 %v1386
          %v1686 = vunpack.c.l.b16 %v1387
          %v1687 = vunpack.c.h.b16 %v1387
          %v1688 = vunpack.c.l.b16 %v1388
          %v1689 = vunpack.c.h.b16 %v1388
          %v1690 = vunpack.c.l.b16 %v1389
          %v1691 = vunpack.c.h.b16 %v1389
          %v1692 = vunpack.c.l.b16 %v1390
          %v1693 = vunpack.c.h.b16 %v1390
          %v1694 = vunpack.c.l.b16 %v1391
          %v1695 = vunpack.c.h.b16 %v1391
          %v1696 = vunpack.c.l.b16 %v1392
          %v1697 = vunpack.c.h.b16 %v1392
          %v1698 = vunpack.c.l.b16 %v1393
          %v1699 = vunpack.c.h.b16 %v1393
          %v1700 = vunpack.c.l.b16 %v1394
          %v1701 = vunpack.c.h.b16 %v1394
          %v1702 = vunpack.c.l.b16 %v1395
          %v1703 = vunpack.c.h.b16 %v1395
          %v1704 = vunpack.c.l.b16 %v1396
          %v1705 = vunpack.c.h.b16 %v1396
          %v1706 = vunpack.c.l.b16 %v1397
          %v1707 = vunpack.c.h.b16 %v1397
          %v1708 = vunpack.c.l.b16 %v1398
          %v1709 = vunpack.c.h.b16 %v1398
          %v1710 = vunpack.c.l.b16 %v1399
          %v1711 = vunpack.c.h.b16 %v1399
          %v1712 = vunpack.c.l.b16 %v1400
          %v1713 = vunpack.c.h.b16 %v1400
          %v1714 = vunpack.c.l.b16 %v1401
          %v1715 = vunpack.c.h.b16 %v1401
          %v1716 = vunpack.c.l.b16 %v1402
          %v1717 = vunpack.c.h.b16 %v1402
          %v1718 = vunpack.c.l.b16 %v1403
          %v1719 = vunpack.c.h.b16 %v1403
          %v1720 = vunpack.c.l.b16 %v1404
          %v1721 = vunpack.c.h.b16 %v1404
          %v1722 = vunpack.c.l.b16 %v1405
          %v1723 = vunpack.c.h.b16 %v1405
          %v1724 = vunpack.c.l.b16 %v1406
          %v1725 = vunpack.c.h.b16 %v1406
          %v1726 = vunpack.c.l.b16 %v1407
          %v1727 = vunpack.c.h.b16 %v1407
          %v1728 = vunpack.c.l.b16 %v1408
          %v1729 = vunpack.c.h.b16 %v1408
          %v1730 = vunpack.c.l.b16 %v1409
          %v1731 = vunpack.c.h.b16 %v1409
          %v1732 = vunpack.c.l.b16 %v1410
          %v1733 = vunpack.c.h.b16 %v1410
          %v1734 = vunpack.c.l.b16 %v1411
          %v1735 = vunpack.c.h.b16 %v1411
          %v1736 = vunpack.c.l.b16 %v1412
          %v1737 = vunpack.c.h.b16 %v1412
          %v1738 = vunpack.c.l.b16 %v1413
          %v1739 = vunpack.c.h.b16 %v1413
          %v1740 = vunpack.c.l.b16 %v1414
          %v1741 = vunpack.c.h.b16 %v1414
          %v1742 = vunpack.c.l.b16 %v1415
          %v1743 = vunpack.c.h.b16 %v1415
          %v1744 = vunpack.c.l.b16 %v1416
          %v1745 = vunpack.c.h.b16 %v1416
          %v1746 = vunpack.c.l.b16 %v1417
          %v1747 = vunpack.c.h.b16 %v1417
          %v1748 = vunpack.c.l.b16 %v1418
          %v1749 = vunpack.c.h.b16 %v1418
          %v1750 = vunpack.c.l.b16 %v1419
          %v1751 = vunpack.c.h.b16 %v1419
          %v1752 = vunpack.c.l.b16 %v1420
          %v1753 = vunpack.c.h.b16 %v1420
          %v1754 = vunpack.c.l.b16 %v1421
          %v1755 = vunpack.c.h.b16 %v1421
          %v1756 = vunpack.c.l.b16 %v1422
          %v1757 = vunpack.c.h.b16 %v1422
          %v1758 = vunpack.c.l.b16 %v1423
          %v1759 = vunpack.c.h.b16 %v1423
          %v1760 = vunpack.c.l.b16 %v1424
          %v1761 = vunpack.c.h.b16 %v1424
          %v1762 = vunpack.c.l.b16 %v1425
          %v1763 = vunpack.c.h.b16 %v1425
          %v1764 = vunpack.c.l.b16 %v1426
          %v1765 = vunpack.c.h.b16 %v1426
          %v1766 = vunpack.c.l.b16 %v1427
          %v1767 = vunpack.c.h.b16 %v1427
          %v1768 = vunpack.c.l.b16 %v1428
          %v1769 = vunpack.c.h.b16 %v1428
          %v1770 = vunpack.c.l.b16 %v1429
          %v1771 = vunpack.c.h.b16 %v1429
          %v1772 = vunpack.c.l.b16 %v1430
          %v1773 = vunpack.c.h.b16 %v1430
          %v1774 = vunpack.c.l.b16 %v1431
          %v1775 = vunpack.c.h.b16 %v1431
          %v1776 = vunpack.c.l.b16 %v1432
          %v1777 = vunpack.c.h.b16 %v1432
          %v1778 = vunpack.c.l.b16 %v1433
          %v1779 = vunpack.c.h.b16 %v1433
          %v1780 = vunpack.c.l.b16 %v1434
          %v1781 = vunpack.c.h.b16 %v1434
          %v1782 = vunpack.c.l.b16 %v1435
          %v1783 = vunpack.c.h.b16 %v1435
          %v1784 = vunpack.c.l.b16 %v1436
          %v1785 = vunpack.c.h.b16 %v1436
          %v1786 = vunpack.c.l.b16 %v1437
          %v1787 = vunpack.c.h.b16 %v1437
          %v1788 = vunpack.c.l.b16 %v1438
          %v1789 = vunpack.c.h.b16 %v1438
          %v1790 = vunpack.c.l.b16 %v1439
          %v1791 = vunpack.c.h.b16 %v1439
          %v1792 = vunpack.c.l.b16 %v1440
          %v1793 = vunpack.c.h.b16 %v1440
          %v1794 = vunpack.c.l.b16 %v1441
          %v1795 = vunpack.c.h.b16 %v1441
          %v1796 = vunpack.c.l.b16 %v1442
          %v1797 = vunpack.c.h.b16 %v1442
          %v1798 = vunpack.c.l.b16 %v1443
          %v1799 = vunpack.c.h.b16 %v1443
          %v1800 = vunpack.c.l.b16 %v1444
          %v1801 = vunpack.c.h.b16 %v1444
          %v1802 = vunpack.c.l.b16 %v1445
          %v1803 = vunpack.c.h.b16 %v1445
          %v1804 = vunpack.c.l.b16 %v1446
          %v1805 = vunpack.c.h.b16 %v1446
          %v1806 = vunpack.c.l.b16 %v1447
          %v1807 = vunpack.c.h.b16 %v1447
          %v1808 = vunpack.c.l.b16 %v1448
          %v1809 = vunpack.c.h.b16 %v1448
          %v1810 = vunpack.c.l.b16 %v1449
          %v1811 = vunpack.c.h.b16 %v1449
          %v1812 = vunpack.c.l.b16 %v1450
          %v1813 = vunpack.c.h.b16 %v1450
          %v1814 = vunpack.c.l.b16 %v1451
          %v1815 = vunpack.c.h.b16 %v1451
          %v1816 = vunpack.c.l.b16 %v1452
          %v1817 = vunpack.c.h.b16 %v1452
          %v1818 = vunpack.c.l.b16 %v1453
          %v1819 = vunpack.c.h.b16 %v1453
          %v1820 = vunpack.c.l.b16 %v1454
          %v1821 = vunpack.c.h.b16 %v1454
          %v1822 = vunpack.c.l.b16 %v1455
          %v1823 = vunpack.c.h.b16 %v1455
          %v1824 = vunpack.c.l.b16 %v1456
          %v1825 = vunpack.c.h.b16 %v1456
          %v1826 = vunpack.c.l.b16 %v1457
          %v1827 = vunpack.c.h.b16 %v1457
          %v1828 = vunpack.c.l.b16 %v1458
          %v1829 = vunpack.c.h.b16 %v1458
          %v1830 = vunpack.c.l.b16 %v1459
          %v1831 = vunpack.c.h.b16 %v1459
          %v1832 = vunpack.c.l.b16 %v1460
          %v1833 = vunpack.c.h.b16 %v1460
          %v1834 = vunpack.c.l.b16 %v1461
          %v1835 = vunpack.c.h.b16 %v1461
          %v1836 = vunpack.c.l.b16 %v1462
          %v1837 = vunpack.c.h.b16 %v1462
          %v1838 = vunpack.c.l.b16 %v1463
          %v1839 = vunpack.c.h.b16 %v1463
          %v1840 = vunpack.c.l.b16 %v1464
          %v1841 = vunpack.c.h.b16 %v1464
          %v1842 = vunpack.c.l.b16 %v1465
          %v1843 = vunpack.c.h.b16 %v1465
          %v1844 = vunpack.c.l.b16 %v1466
          %v1845 = vunpack.c.h.b16 %v1466
          %v1846 = vunpack.c.l.b16 %v1467
          %v1847 = vunpack.c.h.b16 %v1467
          %v1848 = vunpack.c.l.b16 %v1468
          %v1849 = vunpack.c.h.b16 %v1468
          %v1850 = vunpack.c.l.b16 %v1469
          %v1851 = vunpack.c.h.b16 %v1469
          %v1852 = vunpack.c.l.b16 %v1470
          %v1853 = vunpack.c.h.b16 %v1470
          %v1854 = vunpack.c.l.b16 %v1471
          %v1855 = vunpack.c.h.b16 %v1471
          %v1856 = vpack.c.b16 %v1604, %v1600
          %v1857 = vpack.c.b16 %v1605, %v1601
          %v1858 = vpack.c.b16 %v1606, %v1602
          %v1859 = vpack.c.b16 %v1607, %v1603
          %v1860 = vpack.c.b16 %v1612, %v1608
          %v1861 = vpack.c.b16 %v1613, %v1609
          %v1862 = vpack.c.b16 %v1614, %v1610
          %v1863 = vpack.c.b16 %v1615, %v1611
          %v1864 = vpack.c.b16 %v1620, %v1616
          %v1865 = vpack.c.b16 %v1621, %v1617
          %v1866 = vpack.c.b16 %v1622, %v1618
          %v1867 = vpack.c.b16 %v1623, %v1619
          %v1868 = vpack.c.b16 %v1628, %v1624
          %v1869 = vpack.c.b16 %v1629, %v1625
          %v1870 = vpack.c.b16 %v1630, %v1626
          %v1871 = vpack.c.b16 %v1631, %v1627
          %v1872 = vpack.c.b16 %v1636, %v1632
          %v1873 = vpack.c.b16 %v1637, %v1633
          %v1874 = vpack.c.b16 %v1638, %v1634
          %v1875 = vpack.c.b16 %v1639, %v1635
          %v1876 = vpack.c.b16 %v1644, %v1640
          %v1877 = vpack.c.b16 %v1645, %v1641
          %v1878 = vpack.c.b16 %v1646, %v1642
          %v1879 = vpack.c.b16 %v1647, %v1643
          %v1880 = vpack.c.b16 %v1652, %v1648
          %v1881 = vpack.c.b16 %v1653, %v1649
          %v1882 = vpack.c.b16 %v1654, %v1650
          %v1883 = vpack.c.b16 %v1655, %v1651
          %v1884 = vpack.c.b16 %v1660, %v1656
          %v1885 = vpack.c.b16 %v1661, %v1657
          %v1886 = vpack.c.b16 %v1662, %v1658
          %v1887 = vpack.c.b16 %v1663, %v1659
          %v1888 = vpack.c.b16 %v1668, %v1664
          %v1889 = vpack.c.b16 %v1669, %v1665
          %v1890 = vpack.c.b16 %v1670, %v1666
          %v1891 = vpack.c.b16 %v1671, %v1667
          %v1892 = vpack.c.b16 %v1676, %v1672
          %v1893 = vpack.c.b16 %v1677, %v1673
          %v1894 = vpack.c.b16 %v1678, %v1674
          %v1895 = vpack.c.b16 %v1679, %v1675
          %v1896 = vpack.c.b16 %v1684, %v1680
          %v1897 = vpack.c.b16 %v1685, %v1681
          %v1898 = vpack.c.b16 %v1686, %v1682
          %v1899 = vpack.c.b16 %v1687, %v1683
          %v1900 = vpack.c.b16 %v1692, %v1688
          %v1901 = vpack.c.b16 %v1693, %v1689
          %v1902 = vpack.c.b16 %v1694, %v1690
          %v1903 = vpack.c.b16 %v1695, %v1691
          %v1904 = vpack.c.b16 %v1700, %v1696
          %v1905 = vpack.c.b16 %v1701, %v1697
          %v1906 = vpack.c.b16 %v1702, %v1698
          %v1907 = vpack.c.b16 %v1703, %v1699
          %v1908 = vpack.c.b16 %v1708, %v1704
          %v1909 = vpack.c.b16 %v1709, %v1705
          %v1910 = vpack.c.b16 %v1710, %v1706
          %v1911 = vpack.c.b16 %v1711, %v1707
          %v1912 = vpack.c.b16 %v1716, %v1712
          %v1913 = vpack.c.b16 %v1717, %v1713
          %v1914 = vpack.c.b16 %v1718, %v1714
          %v1915 = vpack.c.b16 %v1719, %v1715
          %v1916 = vpack.c.b16 %v1724, %v1720
          %v1917 = vpack.c.b16 %v1725, %v1721
          %v1918 = vpack.c.b16 %v1726, %v1722
          %v1919 = vpack.c.b16 %v1727, %v1723
          %v1920 = vpack.c.b16 %v1732, %v1728
          %v1921 = vpack.c.b16 %v1733, %v1729
          %v1922 = vpack.c.b16 %v1734, %v1730
          %v1923 = vpack.c.b16 %v1735, %v1731
          %v1924 = vpack.c.b16 %v1740, %v1736
          %v1925 = vpack.c.b16 %v1741, %v1737
          %v1926 = vpack.c.b16 %v1742, %v1738
          %v1927 = vpack.c.b16 %v1743, %v1739
          %v1928 = vpack.c.b16 %v1748, %v1744
          %v1929 = vpack.c.b16 %v1749, %v1745
          %v1930 = vpack.c.b16 %v1750, %v1746
          %v1931 = vpack.c.b16 %v1751, %v1747
          %v1932 = vpack.c.b16 %v1756, %v1752
          %v1933 = vpack.c.b16 %v1757, %v1753
          %v1934 = vpack.c.b16 %v1758, %v1754
          %v1935 = vpack.c.b16 %v1759, %v1755
          %v1936 = vpack.c.b16 %v1764, %v1760
          %v1937 = vpack.c.b16 %v1765, %v1761
          %v1938 = vpack.c.b16 %v1766, %v1762
          %v1939 = vpack.c.b16 %v1767, %v1763
          %v1940 = vpack.c.b16 %v1772, %v1768
          %v1941 = vpack.c.b16 %v1773, %v1769
          %v1942 = vpack.c.b16 %v1774, %v1770
          %v1943 = vpack.c.b16 %v1775, %v1771
          %v1944 = vpack.c.b16 %v1780, %v1776
          %v1945 = vpack.c.b16 %v1781, %v1777
          %v1946 = vpack.c.b16 %v1782, %v1778
          %v1947 = vpack.c.b16 %v1783, %v1779
          %v1948 = vpack.c.b16 %v1788, %v1784
          %v1949 = vpack.c.b16 %v1789, %v1785
          %v1950 = vpack.c.b16 %v1790, %v1786
          %v1951 = vpack.c.b16 %v1791, %v1787
          %v1952 = vpack.c.b16 %v1796, %v1792
          %v1953 = vpack.c.b16 %v1797, %v1793
          %v1954 = vpack.c.b16 %v1798, %v1794
          %v1955 = vpack.c.b16 %v1799, %v1795
          %v1956 = vpack.c.b16 %v1804, %v1800
          %v1957 = vpack.c.b16 %v1805, %v1801
          %v1958 = vpack.c.b16 %v1806, %v1802
          %v1959 = vpack.c.b16 %v1807, %v1803
          %v1960 = vpack.c.b16 %v1812, %v1808
          %v1961 = vpack.c.b16 %v1813, %v1809
          %v1962 = vpack.c.b16 %v1814, %v1810
          %v1963 = vpack.c.b16 %v1815, %v1811
          %v1964 = vpack.c.b16 %v1820, %v1816
          %v1965 = vpack.c.b16 %v1821, %v1817
          %v1966 = vpack.c.b16 %v1822, %v1818
          %v1967 = vpack.c.b16 %v1823, %v1819
          %v1968 = vpack.c.b16 %v1828, %v1824
          %v1969 = vpack.c.b16 %v1829, %v1825
          %v1970 = vpack.c.b16 %v1830, %v1826
          %v1971 = vpack.c.b16 %v1831, %v1827
          %v1972 = vpack.c.b16 %v1836, %v1832
          %v1973 = vpack.c.b16 %v1837, %v1833
          %v1974 = vpack.c.b16 %v1838, %v1834
          %v1975 = vpack.c.b16 %v1839, %v1835
          %v1976 = vpack.c.b16 %v1844, %v1840
          %v1977 = vpack.c.b16 %v1845, %v1841
          %v1978 = vpack.c.b16 %v1846, %v1842
          %v1979 = vpack.c.b16 %v1847, %v1843
          %v1980 = vpack.c.b16 %v1852, %v1848
          %v1981 = vpack.c.b16 %v1853, %v1849
          %v1982 = vpack.c.b16 %v1854, %v1850
          %v1983 = vpack.c.b16 %v1855, %v1851
          %2112 = vmatpush.bf16.msra.mxu0 %v1884
          %2113 = vmatpush.bf16.msra.mxu0 %v1880
          %2114 = vmatpush.bf16.msra.mxu0 %v1876
          %2115 = vmatpush.bf16.msra.mxu0 %v1872
          %2116 = vmatpush.bf16.msra.mxu0 %v1868
          %2117 = vmatpush.bf16.msra.mxu0 %v1864
          %2118 = vmatpush.bf16.msra.mxu0 %v1860
          %2119 = vmatpush.bf16.msra.mxu0 %v1856
          %2120 = vmatmul.bf16.gmra.mxu0 %v1340
          %v2121 = vpop.f32.mrf.mxu0
          %v2122 = vadd.f32 0.0, %v2121
          %v2123 = vpop.f32.mrf.mxu0
          %2124 = vdwg.mxu0
          %2125 = vmatpush.bf16.msra.mxu0 %v1916
          %2126 = vmatpush.bf16.msra.mxu0 %v1912
          %2127 = vmatpush.bf16.msra.mxu0 %v1908
          %2128 = vmatpush.bf16.msra.mxu0 %v1904
          %2129 = vmatpush.bf16.msra.mxu0 %v1900
          %2130 = vmatpush.bf16.msra.mxu0 %v1896
          %2131 = vmatpush.bf16.msra.mxu0 %v1892
          %2132 = vmatpush.bf16.msra.mxu0 %v1888
          %2133 = vmatmul.bf16.gmra.mxu0 %v1341
          %v2134 = vpop.f32.mrf.mxu0
          %v2135 = vadd.f32 %v2122, %v2134
          %v2136 = vpop.f32.mrf.mxu0
          %2137 = vdwg.mxu0
          %2138 = vmatpush.bf16.msra.mxu0 %v1948
          %2139 = vmatpush.bf16.msra.mxu0 %v1944
          %2140 = vmatpush.bf16.msra.mxu0 %v1940
          %2141 = vmatpush.bf16.msra.mxu0 %v1936
          %2142 = vmatpush.bf16.msra.mxu0 %v1932
          %2143 = vmatpush.bf16.msra.mxu0 %v1928
          %2144 = vmatpush.bf16.msra.mxu0 %v1924
          %2145 = vmatpush.bf16.msra.mxu0 %v1920
          %2146 = vmatmul.bf16.gmra.mxu0 %v1342
          %v2147 = vpop.f32.mrf.mxu0
          %v2148 = vadd.f32 %v2135, %v2147
          %v2149 = vpop.f32.mrf.mxu0
          %2150 = vdwg.mxu0
          %2151 = vmatpush.bf16.msra.mxu0 %v1980
          %2152 = vmatpush.bf16.msra.mxu0 %v1976
          %2153 = vmatpush.bf16.msra.mxu0 %v1972
          %2154 = vmatpush.bf16.msra.mxu0 %v1968
          %2155 = vmatpush.bf16.msra.mxu0 %v1964
          %2156 = vmatpush.bf16.msra.mxu0 %v1960
          %2157 = vmatpush.bf16.msra.mxu0 %v1956
          %2158 = vmatpush.bf16.msra.mxu0 %v1952
          %2159 = vmatmul.bf16.gmra.mxu0 %v1343
          %v2160 = vpop.f32.mrf.mxu0
          %v2161 = vadd.f32 %v2148, %v2160
          %v2162 = vpop.f32.mrf.mxu0
          %2163 = vdwg.mxu0
          %2164 = vmatpush.bf16.msra.mxu0 %v1885
          %2165 = vmatpush.bf16.msra.mxu0 %v1881
          %2166 = vmatpush.bf16.msra.mxu0 %v1877
          %2167 = vmatpush.bf16.msra.mxu0 %v1873
          %2168 = vmatpush.bf16.msra.mxu0 %v1869
          %2169 = vmatpush.bf16.msra.mxu0 %v1865
          %2170 = vmatpush.bf16.msra.mxu0 %v1861
          %2171 = vmatpush.bf16.msra.mxu0 %v1857
          %2172 = vmatmul.bf16.gmra.mxu0 %v1340
          %v2173 = vpop.f32.mrf.mxu0
          %v2174 = vadd.f32 0.0, %v2173
          %v2175 = vpop.f32.mrf.mxu0
          %2176 = vdwg.mxu0
          %2177 = vmatpush.bf16.msra.mxu0 %v1917
          %2178 = vmatpush.bf16.msra.mxu0 %v1913
          %2179 = vmatpush.bf16.msra.mxu0 %v1909
          %2180 = vmatpush.bf16.msra.mxu0 %v1905
          %2181 = vmatpush.bf16.msra.mxu0 %v1901
          %2182 = vmatpush.bf16.msra.mxu0 %v1897
          %2183 = vmatpush.bf16.msra.mxu0 %v1893
          %2184 = vmatpush.bf16.msra.mxu0 %v1889
          %2185 = vmatmul.bf16.gmra.mxu0 %v1341
          %v2186 = vpop.f32.mrf.mxu0
          %v2187 = vadd.f32 %v2174, %v2186
          %v2188 = vpop.f32.mrf.mxu0
          %2189 = vdwg.mxu0
          %2190 = vmatpush.bf16.msra.mxu0 %v1949
          %2191 = vmatpush.bf16.msra.mxu0 %v1945
          %2192 = vmatpush.bf16.msra.mxu0 %v1941
          %2193 = vmatpush.bf16.msra.mxu0 %v1937
          %2194 = vmatpush.bf16.msra.mxu0 %v1933
          %2195 = vmatpush.bf16.msra.mxu0 %v1929
          %2196 = vmatpush.bf16.msra.mxu0 %v1925
          %2197 = vmatpush.bf16.msra.mxu0 %v1921
          %2198 = vmatmul.bf16.gmra.mxu0 %v1342
          %v2199 = vpop.f32.mrf.mxu0
          %v2200 = vadd.f32 %v2187, %v2199
          %v2201 = vpop.f32.mrf.mxu0
          %2202 = vdwg.mxu0
          %2203 = vmatpush.bf16.msra.mxu0 %v1981
          %2204 = vmatpush.bf16.msra.mxu0 %v1977
          %2205 = vmatpush.bf16.msra.mxu0 %v1973
          %2206 = vmatpush.bf16.msra.mxu0 %v1969
          %2207 = vmatpush.bf16.msra.mxu0 %v1965
          %2208 = vmatpush.bf16.msra.mxu0 %v1961
          %2209 = vmatpush.bf16.msra.mxu0 %v1957
          %2210 = vmatpush.bf16.msra.mxu0 %v1953
          %2211 = vmatmul.bf16.gmra.mxu0 %v1343
          %v2212 = vpop.f32.mrf.mxu0
          %v2213 = vadd.f32 %v2200, %v2212
          %v2214 = vpop.f32.mrf.mxu0
          %2215 = vdwg.mxu0
          %2216 = vmatpush.bf16.msra.mxu0 %v1886
          %2217 = vmatpush.bf16.msra.mxu0 %v1882
          %2218 = vmatpush.bf16.msra.mxu0 %v1878
          %2219 = vmatpush.bf16.msra.mxu0 %v1874
          %2220 = vmatpush.bf16.msra.mxu0 %v1870
          %2221 = vmatpush.bf16.msra.mxu0 %v1866
          %2222 = vmatpush.bf16.msra.mxu0 %v1862
          %2223 = vmatpush.bf16.msra.mxu0 %v1858
          %2224 = vmatmul.bf16.gmra.mxu0 %v1340
          %v2225 = vpop.f32.mrf.mxu0
          %v2226 = vadd.f32 0.0, %v2225
          %v2227 = vpop.f32.mrf.mxu0
          %2228 = vdwg.mxu0
          %2229 = vmatpush.bf16.msra.mxu0 %v1918
          %2230 = vmatpush.bf16.msra.mxu0 %v1914
          %2231 = vmatpush.bf16.msra.mxu0 %v1910
          %2232 = vmatpush.bf16.msra.mxu0 %v1906
          %2233 = vmatpush.bf16.msra.mxu0 %v1902
          %2234 = vmatpush.bf16.msra.mxu0 %v1898
          %2235 = vmatpush.bf16.msra.mxu0 %v1894
          %2236 = vmatpush.bf16.msra.mxu0 %v1890
          %2237 = vmatmul.bf16.gmra.mxu0 %v1341
          %v2238 = vpop.f32.mrf.mxu0
          %v2239 = vadd.f32 %v2226, %v2238
          %v2240 = vpop.f32.mrf.mxu0
          %2241 = vdwg.mxu0
          %2242 = vmatpush.bf16.msra.mxu0 %v1950
          %2243 = vmatpush.bf16.msra.mxu0 %v1946
          %2244 = vmatpush.bf16.msra.mxu0 %v1942
          %2245 = vmatpush.bf16.msra.mxu0 %v1938
          %2246 = vmatpush.bf16.msra.mxu0 %v1934
          %2247 = vmatpush.bf16.msra.mxu0 %v1930
          %2248 = vmatpush.bf16.msra.mxu0 %v1926
          %2249 = vmatpush.bf16.msra.mxu0 %v1922
          %2250 = vmatmul.bf16.gmra.mxu0 %v1342
          %v2251 = vpop.f32.mrf.mxu0
          %v2252 = vadd.f32 %v2239, %v2251
          %v2253 = vpop.f32.mrf.mxu0
          %2254 = vdwg.mxu0
          %2255 = vmatpush.bf16.msra.mxu0 %v1982
          %2256 = vmatpush.bf16.msra.mxu0 %v1978
          %2257 = vmatpush.bf16.msra.mxu0 %v1974
          %2258 = vmatpush.bf16.msra.mxu0 %v1970
          %2259 = vmatpush.bf16.msra.mxu0 %v1966
          %2260 = vmatpush.bf16.msra.mxu0 %v1962
          %2261 = vmatpush.bf16.msra.mxu0 %v1958
          %2262 = vmatpush.bf16.msra.mxu0 %v1954
          %2263 = vmatmul.bf16.gmra.mxu0 %v1343
          %v2264 = vpop.f32.mrf.mxu0
          %v2265 = vadd.f32 %v2252, %v2264
          %v2266 = vpop.f32.mrf.mxu0
          %2267 = vdwg.mxu0
          %2268 = vmatpush.bf16.msra.mxu0 %v1887
          %2269 = vmatpush.bf16.msra.mxu0 %v1883
          %2270 = vmatpush.bf16.msra.mxu0 %v1879
          %2271 = vmatpush.bf16.msra.mxu0 %v1875
          %2272 = vmatpush.bf16.msra.mxu0 %v1871
          %2273 = vmatpush.bf16.msra.mxu0 %v1867
          %2274 = vmatpush.bf16.msra.mxu0 %v1863
          %2275 = vmatpush.bf16.msra.mxu0 %v1859
          %2276 = vmatmul.bf16.gmra.mxu0 %v1340
          %v2277 = vpop.f32.mrf.mxu0
          %v2278 = vadd.f32 0.0, %v2277
          %v2279 = vpop.f32.mrf.mxu0
          %2280 = vdwg.mxu0
          %2281 = vmatpush.bf16.msra.mxu0 %v1919
          %2282 = vmatpush.bf16.msra.mxu0 %v1915
          %2283 = vmatpush.bf16.msra.mxu0 %v1911
          %2284 = vmatpush.bf16.msra.mxu0 %v1907
          %2285 = vmatpush.bf16.msra.mxu0 %v1903
          %2286 = vmatpush.bf16.msra.mxu0 %v1899
          %2287 = vmatpush.bf16.msra.mxu0 %v1895
          %2288 = vmatpush.bf16.msra.mxu0 %v1891
          %2289 = vmatmul.bf16.gmra.mxu0 %v1341
          %v2290 = vpop.f32.mrf.mxu0
          %v2291 = vadd.f32 %v2278, %v2290
          %v2292 = vpop.f32.mrf.mxu0
          %2293 = vdwg.mxu0
          %2294 = vmatpush.bf16.msra.mxu0 %v1951
          %2295 = vmatpush.bf16.msra.mxu0 %v1947
          %2296 = vmatpush.bf16.msra.mxu0 %v1943
          %2297 = vmatpush.bf16.msra.mxu0 %v1939
          %2298 = vmatpush.bf16.msra.mxu0 %v1935
          %2299 = vmatpush.bf16.msra.mxu0 %v1931
          %2300 = vmatpush.bf16.msra.mxu0 %v1927
          %2301 = vmatpush.bf16.msra.mxu0 %v1923
          %2302 = vmatmul.bf16.gmra.mxu0 %v1342
          %v2303 = vpop.f32.mrf.mxu0
          %v2304 = vadd.f32 %v2291, %v2303
          %v2305 = vpop.f32.mrf.mxu0
          %2306 = vdwg.mxu0
          %2307 = vmatpush.bf16.msra.mxu0 %v1983
          %2308 = vmatpush.bf16.msra.mxu0 %v1979
          %2309 = vmatpush.bf16.msra.mxu0 %v1975
          %2310 = vmatpush.bf16.msra.mxu0 %v1971
          %2311 = vmatpush.bf16.msra.mxu0 %v1967
          %2312 = vmatpush.bf16.msra.mxu0 %v1963
          %2313 = vmatpush.bf16.msra.mxu0 %v1959
          %2314 = vmatpush.bf16.msra.mxu0 %v1955
          %2315 = vmatmul.bf16.gmra.mxu0 %v1343
          %v2316 = vpop.f32.mrf.mxu0
          %v2317 = vadd.f32 %v2304, %v2316
          %v2318 = vpop.f32.mrf.mxu0
          %2319 = vdwg.mxu0
          %v2320 = vld [vmem:[%s6] sm:$0xf]
          %v2321 = vld [vmem:[%s7] sm:$0xf]
          %v2322 = vsel %vm1182, %v2161, 0.0
          %v2323 = vrot.slane %v2322, 4
          %v2324 = vadd.f32 %v2322, %v2323
          %v2325 = vrot.slane %v2324, 2
          %v2326 = vadd.f32 %v2324, %v2325
          %v2327 = vrot.slane %v2326, 1
          %v2328 = vadd.f32 %v2326, %v2327
          %v2329 = vsel %vm1182, %v2213, 0.0
          %v2330 = vrot.slane %v2329, 4
          %v2331 = vadd.f32 %v2329, %v2330
          %v2332 = vrot.slane %v2331, 2
          %v2333 = vadd.f32 %v2331, %v2332
          %v2334 = vrot.slane %v2333, 1
          %v2335 = vadd.f32 %v2333, %v2334
          %v2336 = vsel %vm1182, %v2265, 0.0
          %v2337 = vrot.slane %v2336, 4
          %v2338 = vadd.f32 %v2336, %v2337
          %v2339 = vrot.slane %v2338, 2
          %v2340 = vadd.f32 %v2338, %v2339
          %v2341 = vrot.slane %v2340, 1
          %v2342 = vadd.f32 %v2340, %v2341
          %v2343 = vsel %vm1182, %v2317, 0.0
          %v2344 = vrot.slane %v2343, 4
          %v2345 = vadd.f32 %v2343, %v2344
          %v2346 = vrot.slane %v2345, 2
          %v2347 = vadd.f32 %v2345, %v2346
          %v2348 = vrot.slane %v2347, 1
          %v2349 = vadd.f32 %v2347, %v2348
          %v2350 = vmul.f32 %v2328, %v1217
          %v2351 = vmul.f32 %v2335, %v1217
          %v2352 = vmul.f32 %v2342, %v1217
          %v2353 = vmul.f32 %v2349, %v1217
          %v2354 = vsub.f32 %v2161, %v2350
          %v2355 = vsub.f32 %v2213, %v2351
          %v2356 = vsub.f32 %v2265, %v2352
          %v2357 = vsub.f32 %v2317, %v2353
          %v2358 = vmul.f32 %v2354, %v2354
          %v2359 = vmul.f32 %v2355, %v2355
          %v2360 = vmul.f32 %v2356, %v2356
          %v2361 = vmul.f32 %v2357, %v2357
          %v2362 = vsel %vm1182, %v2358, 0.0
          %v2363 = vrot.slane %v2362, 4
          %v2364 = vadd.f32 %v2362, %v2363
          %v2365 = vrot.slane %v2364, 2
          %v2366 = vadd.f32 %v2364, %v2365
          %v2367 = vrot.slane %v2366, 1
          %v2368 = vadd.f32 %v2366, %v2367
          %v2369 = vsel %vm1182, %v2359, 0.0
          %v2370 = vrot.slane %v2369, 4
          %v2371 = vadd.f32 %v2369, %v2370
          %v2372 = vrot.slane %v2371, 2
          %v2373 = vadd.f32 %v2371, %v2372
          %v2374 = vrot.slane %v2373, 1
          %v2375 = vadd.f32 %v2373, %v2374
          %v2376 = vsel %vm1182, %v2360, 0.0
          %v2377 = vrot.slane %v2376, 4
          %v2378 = vadd.f32 %v2376, %v2377
          %v2379 = vrot.slane %v2378, 2
          %v2380 = vadd.f32 %v2378, %v2379
          %v2381 = vrot.slane %v2380, 1
          %v2382 = vadd.f32 %v2380, %v2381
          %v2383 = vsel %vm1182, %v2361, 0.0
          %v2384 = vrot.slane %v2383, 4
          %v2385 = vadd.f32 %v2383, %v2384
          %v2386 = vrot.slane %v2385, 2
          %v2387 = vadd.f32 %v2385, %v2386
          %v2388 = vrot.slane %v2387, 1
          %v2389 = vadd.f32 %v2387, %v2388
          %v2390 = vmul.f32 %v2368, %v1217
          %v2391 = vmul.f32 %v2375, %v1217
          %v2392 = vmul.f32 %v2382, %v1217
          %v2393 = vmul.f32 %v2389, %v1217
          %v2394 = vadd.f32 %v2390, 1e-05
          %v2395 = vadd.f32 %v2391, 1e-05
          %v2396 = vadd.f32 %v2392, 1e-05
          %v2397 = vadd.f32 %v2393, 1e-05
          %v2398 = vrsqrt.pop %v2394
          %v2399 = vmul.f32 %v2398, %v2394
          %v2400 = vmul.f32 %v2399, %v2398
          %v2401 = vmul.f32 0.5, %v2400
          %v2402 = vsub.f32 1.5, %v2401
          %v2403 = vmul.f32 %v2398, %v2402
          %vm2404 = vweird.f32 %v2394
          %vm2405 = vweird.f32 %v2398
          %vm2406 = vmor %vm2404, %vm2405
          %v2407 = vsel %vm2406, %v2398, %v2403
          %v2408 = vrsqrt.pop %v2395
          %v2409 = vmul.f32 %v2408, %v2395
          %v2410 = vmul.f32 %v2409, %v2408
          %v2411 = vmul.f32 0.5, %v2410
          %v2412 = vsub.f32 1.5, %v2411
          %v2413 = vmul.f32 %v2408, %v2412
          %vm2414 = vweird.f32 %v2395
          %vm2415 = vweird.f32 %v2408
          %vm2416 = vmor %vm2414, %vm2415
          %v2417 = vsel %vm2416, %v2408, %v2413
          %v2418 = vrsqrt.pop %v2396
          %v2419 = vmul.f32 %v2418, %v2396
          %v2420 = vmul.f32 %v2419, %v2418
          %v2421 = vmul.f32 0.5, %v2420
          %v2422 = vsub.f32 1.5, %v2421
          %v2423 = vmul.f32 %v2418, %v2422
          %vm2424 = vweird.f32 %v2396
          %vm2425 = vweird.f32 %v2418
          %vm2426 = vmor %vm2424, %vm2425
          %v2427 = vsel %vm2426, %v2418, %v2423
          %v2428 = vrsqrt.pop %v2397
          %v2429 = vmul.f32 %v2428, %v2397
          %v2430 = vmul.f32 %v2429, %v2428
          %v2431 = vmul.f32 0.5, %v2430
          %v2432 = vsub.f32 1.5, %v2431
          %v2433 = vmul.f32 %v2428, %v2432
          %vm2434 = vweird.f32 %v2397
          %vm2435 = vweird.f32 %v2428
          %vm2436 = vmor %vm2434, %vm2435
          %v2437 = vsel %vm2436, %v2428, %v2433
          %v2438 = vmul.f32 %v2354, %v2407
          %v2439 = vmul.f32 %v2355, %v2417
          %v2440 = vmul.f32 %v2356, %v2427
          %v2441 = vmul.f32 %v2357, %v2437
          %v2443 = vperm.slane %v2320, 0
          %v2444 = vperm.slane %v2320, 1
          %v2445 = vperm.slane %v2320, 2
          %v2446 = vperm.slane %v2320, 3
          %v2451 = vmul.f32 %v2438, %v2443
          %v2452 = vmul.f32 %v2439, %v2444
          %v2453 = vmul.f32 %v2440, %v2445
          %v2454 = vmul.f32 %v2441, %v2446
          %v2456 = vperm.slane %v2321, 0
          %v2457 = vperm.slane %v2321, 1
          %v2458 = vperm.slane %v2321, 2
          %v2459 = vperm.slane %v2321, 3
          %v2464 = vadd.f32 %v2451, %v2456
          %v2465 = vadd.f32 %v2452, %v2457
          %v2466 = vadd.f32 %v2453, %v2458
          %v2467 = vadd.f32 %v2454, %v2459
          %v2468 = vmax.f32 %v2464, 0.0
          %v2469 = vmax.f32 %v2465, 0.0
          %v2470 = vmax.f32 %v2466, 0.0
          %v2471 = vmax.f32 %v2467, 0.0
          %v2472 = vpack.c.bf16 %v2468, %v2468
          %v2473 = vpack.c.bf16 %v2469, %v2469
          %v2474 = vpack.c.bf16 %v2470, %v2470
          %v2475 = vpack.c.bf16 %v2471, %v2471
          %v2476 = vld [vmem:[%s8] sm:$0xf]
          %v2477 = vld [vmem:[%s8 + $0x4] sm:$0xf]
          %v2478 = vld [vmem:[%s8 + $0x8] sm:$0xf]
          %v2479 = vld [vmem:[%s8 + $0xc] sm:$0xf]
          %v2480 = vld [vmem:[%s8 + $0x10] sm:$0xf]
          %v2481 = vld [vmem:[%s8 + $0x14] sm:$0xf]
          %v2482 = vld [vmem:[%s8 + $0x18] sm:$0xf]
          %v2483 = vld [vmem:[%s8 + $0x1c] sm:$0xf]
          %v2484 = vld [vmem:[%s8 + $0x20] sm:$0xf]
          %v2485 = vld [vmem:[%s8 + $0x24] sm:$0xf]
          %v2486 = vld [vmem:[%s8 + $0x28] sm:$0xf]
          %v2487 = vld [vmem:[%s8 + $0x2c] sm:$0xf]
          %v2488 = vld [vmem:[%s8 + $0x30] sm:$0xf]
          %v2489 = vld [vmem:[%s8 + $0x34] sm:$0xf]
          %v2490 = vld [vmem:[%s8 + $0x38] sm:$0xf]
          %v2491 = vld [vmem:[%s8 + $0x3c] sm:$0xf]
          %v2492 = vld [vmem:[%s8 + $0x40] sm:$0xf]
          %v2493 = vld [vmem:[%s8 + $0x44] sm:$0xf]
          %v2494 = vld [vmem:[%s8 + $0x48] sm:$0xf]
          %v2495 = vld [vmem:[%s8 + $0x4c] sm:$0xf]
          %v2496 = vld [vmem:[%s8 + $0x50] sm:$0xf]
          %v2497 = vld [vmem:[%s8 + $0x54] sm:$0xf]
          %v2498 = vld [vmem:[%s8 + $0x58] sm:$0xf]
          %v2499 = vld [vmem:[%s8 + $0x5c] sm:$0xf]
          %v2500 = vld [vmem:[%s8 + $0x60] sm:$0xf]
          %v2501 = vld [vmem:[%s8 + $0x64] sm:$0xf]
          %v2502 = vld [vmem:[%s8 + $0x68] sm:$0xf]
          %v2503 = vld [vmem:[%s8 + $0x6c] sm:$0xf]
          %v2504 = vld [vmem:[%s8 + $0x70] sm:$0xf]
          %v2505 = vld [vmem:[%s8 + $0x74] sm:$0xf]
          %v2506 = vld [vmem:[%s8 + $0x78] sm:$0xf]
          %v2507 = vld [vmem:[%s8 + $0x7c] sm:$0xf]
          %v2508 = vld [vmem:[%s8 + $0x80] sm:$0xf]
          %v2509 = vld [vmem:[%s8 + $0x84] sm:$0xf]
          %v2510 = vld [vmem:[%s8 + $0x88] sm:$0xf]
          %v2511 = vld [vmem:[%s8 + $0x8c] sm:$0xf]
          %v2512 = vld [vmem:[%s8 + $0x90] sm:$0xf]
          %v2513 = vld [vmem:[%s8 + $0x94] sm:$0xf]
          %v2514 = vld [vmem:[%s8 + $0x98] sm:$0xf]
          %v2515 = vld [vmem:[%s8 + $0x9c] sm:$0xf]
          %v2516 = vld [vmem:[%s8 + $0xa0] sm:$0xf]
          %v2517 = vld [vmem:[%s8 + $0xa4] sm:$0xf]
          %v2518 = vld [vmem:[%s8 + $0xa8] sm:$0xf]
          %v2519 = vld [vmem:[%s8 + $0xac] sm:$0xf]
          %v2520 = vld [vmem:[%s8 + $0xb0] sm:$0xf]
          %v2521 = vld [vmem:[%s8 + $0xb4] sm:$0xf]
          %v2522 = vld [vmem:[%s8 + $0xb8] sm:$0xf]
          %v2523 = vld [vmem:[%s8 + $0xbc] sm:$0xf]
          %v2524 = vld [vmem:[%s8 + $0xc0] sm:$0xf]
          %v2525 = vld [vmem:[%s8 + $0xc4] sm:$0xf]
          %v2526 = vld [vmem:[%s8 + $0xc8] sm:$0xf]
          %v2527 = vld [vmem:[%s8 + $0xcc] sm:$0xf]
          %v2528 = vld [vmem:[%s8 + $0xd0] sm:$0xf]
          %v2529 = vld [vmem:[%s8 + $0xd4] sm:$0xf]
          %v2530 = vld [vmem:[%s8 + $0xd8] sm:$0xf]
          %v2531 = vld [vmem:[%s8 + $0xdc] sm:$0xf]
          %v2532 = vld [vmem:[%s8 + $0xe0] sm:$0xf]
          %v2533 = vld [vmem:[%s8 + $0xe4] sm:$0xf]
          %v2534 = vld [vmem:[%s8 + $0xe8] sm:$0xf]
          %v2535 = vld [vmem:[%s8 + $0xec] sm:$0xf]
          %v2536 = vld [vmem:[%s8 + $0xf0] sm:$0xf]
          %v2537 = vld [vmem:[%s8 + $0xf4] sm:$0xf]
          %v2538 = vld [vmem:[%s8 + $0xf8] sm:$0xf]
          %v2539 = vld [vmem:[%s8 + $0xfc] sm:$0xf]
          %v2604 = vunpack.c.l.b16 %v2476
          %v2605 = vunpack.c.l.b16 %v2477
          %v2606 = vunpack.c.l.b16 %v2478
          %v2607 = vunpack.c.l.b16 %v2479
          %v2608 = vunpack.c.l.b16 %v2480
          %v2609 = vunpack.c.l.b16 %v2481
          %v2610 = vunpack.c.l.b16 %v2482
          %v2611 = vunpack.c.l.b16 %v2483
          %v2612 = vunpack.c.l.b16 %v2484
          %v2613 = vunpack.c.l.b16 %v2485
          %v2614 = vunpack.c.l.b16 %v2486
          %v2615 = vunpack.c.l.b16 %v2487
          %v2616 = vunpack.c.l.b16 %v2488
          %v2617 = vunpack.c.l.b16 %v2489
          %v2618 = vunpack.c.l.b16 %v2490
          %v2619 = vunpack.c.l.b16 %v2491
          %v2620 = vunpack.c.l.b16 %v2492
          %v2621 = vunpack.c.l.b16 %v2493
          %v2622 = vunpack.c.l.b16 %v2494
          %v2623 = vunpack.c.l.b16 %v2495
          %v2624 = vunpack.c.l.b16 %v2496
          %v2625 = vunpack.c.l.b16 %v2497
          %v2626 = vunpack.c.l.b16 %v2498
          %v2627 = vunpack.c.l.b16 %v2499
          %v2628 = vunpack.c.l.b16 %v2500
          %v2629 = vunpack.c.l.b16 %v2501
          %v2630 = vunpack.c.l.b16 %v2502
          %v2631 = vunpack.c.l.b16 %v2503
          %v2632 = vunpack.c.l.b16 %v2504
          %v2633 = vunpack.c.l.b16 %v2505
          %v2634 = vunpack.c.l.b16 %v2506
          %v2635 = vunpack.c.l.b16 %v2507
          %v2636 = vunpack.c.l.b16 %v2508
          %v2637 = vunpack.c.l.b16 %v2509
          %v2638 = vunpack.c.l.b16 %v2510
          %v2639 = vunpack.c.l.b16 %v2511
          %v2640 = vunpack.c.l.b16 %v2512
          %v2641 = vunpack.c.l.b16 %v2513
          %v2642 = vunpack.c.l.b16 %v2514
          %v2643 = vunpack.c.l.b16 %v2515
          %v2644 = vunpack.c.l.b16 %v2516
          %v2645 = vunpack.c.l.b16 %v2517
          %v2646 = vunpack.c.l.b16 %v2518
          %v2647 = vunpack.c.l.b16 %v2519
          %v2648 = vunpack.c.l.b16 %v2520
          %v2649 = vunpack.c.l.b16 %v2521
          %v2650 = vunpack.c.l.b16 %v2522
          %v2651 = vunpack.c.l.b16 %v2523
          %v2652 = vunpack.c.l.b16 %v2524
          %v2653 = vunpack.c.l.b16 %v2525
          %v2654 = vunpack.c.l.b16 %v2526
          %v2655 = vunpack.c.l.b16 %v2527
          %v2656 = vunpack.c.l.b16 %v2528
          %v2657 = vunpack.c.l.b16 %v2529
          %v2658 = vunpack.c.l.b16 %v2530
          %v2659 = vunpack.c.l.b16 %v2531
          %v2660 = vunpack.c.l.b16 %v2532
          %v2661 = vunpack.c.l.b16 %v2533
          %v2662 = vunpack.c.l.b16 %v2534
          %v2663 = vunpack.c.l.b16 %v2535
          %v2664 = vunpack.c.l.b16 %v2536
          %v2665 = vunpack.c.l.b16 %v2537
          %v2666 = vunpack.c.l.b16 %v2538
          %v2667 = vunpack.c.l.b16 %v2539
          %v2668 = vpack.c.b16 %v2605, %v2604
          %v2669 = vpack.c.b16 %v2607, %v2606
          %v2670 = vpack.c.b16 %v2609, %v2608
          %v2671 = vpack.c.b16 %v2611, %v2610
          %v2672 = vpack.c.b16 %v2613, %v2612
          %v2673 = vpack.c.b16 %v2615, %v2614
          %v2674 = vpack.c.b16 %v2617, %v2616
          %v2675 = vpack.c.b16 %v2619, %v2618
          %v2676 = vpack.c.b16 %v2621, %v2620
          %v2677 = vpack.c.b16 %v2623, %v2622
          %v2678 = vpack.c.b16 %v2625, %v2624
          %v2679 = vpack.c.b16 %v2627, %v2626
          %v2680 = vpack.c.b16 %v2629, %v2628
          %v2681 = vpack.c.b16 %v2631, %v2630
          %v2682 = vpack.c.b16 %v2633, %v2632
          %v2683 = vpack.c.b16 %v2635, %v2634
          %v2684 = vpack.c.b16 %v2637, %v2636
          %v2685 = vpack.c.b16 %v2639, %v2638
          %v2686 = vpack.c.b16 %v2641, %v2640
          %v2687 = vpack.c.b16 %v2643, %v2642
          %v2688 = vpack.c.b16 %v2645, %v2644
          %v2689 = vpack.c.b16 %v2647, %v2646
          %v2690 = vpack.c.b16 %v2649, %v2648
          %v2691 = vpack.c.b16 %v2651, %v2650
          %v2692 = vpack.c.b16 %v2653, %v2652
          %v2693 = vpack.c.b16 %v2655, %v2654
          %v2694 = vpack.c.b16 %v2657, %v2656
          %v2695 = vpack.c.b16 %v2659, %v2658
          %v2696 = vpack.c.b16 %v2661, %v2660
          %v2697 = vpack.c.b16 %v2663, %v2662
          %v2698 = vpack.c.b16 %v2665, %v2664
          %v2699 = vpack.c.b16 %v2667, %v2666
          %2732 = vmatpush.bf16.msra.mxu0 %v2675
          %2733 = vmatpush.bf16.msra.mxu0 %v2674
          %2734 = vmatpush.bf16.msra.mxu0 %v2673
          %2735 = vmatpush.bf16.msra.mxu0 %v2672
          %2736 = vmatpush.bf16.msra.mxu0 %v2671
          %2737 = vmatpush.bf16.msra.mxu0 %v2670
          %2738 = vmatpush.bf16.msra.mxu0 %v2669
          %2739 = vmatpush.bf16.msra.mxu0 %v2668
          %2740 = vmatmul.bf16.gmra.mxu0 %v2472
          %v2741 = vpop.f32.mrf.mxu0
          %v2742 = vadd.f32 0.0, %v2741
          %v2743 = vpop.f32.mrf.mxu0
          %2744 = vdwg.mxu0
          %2745 = vmatpush.bf16.msra.mxu0 %v2683
          %2746 = vmatpush.bf16.msra.mxu0 %v2682
          %2747 = vmatpush.bf16.msra.mxu0 %v2681
          %2748 = vmatpush.bf16.msra.mxu0 %v2680
          %2749 = vmatpush.bf16.msra.mxu0 %v2679
          %2750 = vmatpush.bf16.msra.mxu0 %v2678
          %2751 = vmatpush.bf16.msra.mxu0 %v2677
          %2752 = vmatpush.bf16.msra.mxu0 %v2676
          %2753 = vmatmul.bf16.gmra.mxu0 %v2473
          %v2754 = vpop.f32.mrf.mxu0
          %v2755 = vadd.f32 %v2742, %v2754
          %v2756 = vpop.f32.mrf.mxu0
          %2757 = vdwg.mxu0
          %2758 = vmatpush.bf16.msra.mxu0 %v2691
          %2759 = vmatpush.bf16.msra.mxu0 %v2690
          %2760 = vmatpush.bf16.msra.mxu0 %v2689
          %2761 = vmatpush.bf16.msra.mxu0 %v2688
          %2762 = vmatpush.bf16.msra.mxu0 %v2687
          %2763 = vmatpush.bf16.msra.mxu0 %v2686
          %2764 = vmatpush.bf16.msra.mxu0 %v2685
          %2765 = vmatpush.bf16.msra.mxu0 %v2684
          %2766 = vmatmul.bf16.gmra.mxu0 %v2474
          %v2767 = vpop.f32.mrf.mxu0
          %v2768 = vadd.f32 %v2755, %v2767
          %v2769 = vpop.f32.mrf.mxu0
          %2770 = vdwg.mxu0
          %2771 = vmatpush.bf16.msra.mxu0 %v2699
          %2772 = vmatpush.bf16.msra.mxu0 %v2698
          %2773 = vmatpush.bf16.msra.mxu0 %v2697
          %2774 = vmatpush.bf16.msra.mxu0 %v2696
          %2775 = vmatpush.bf16.msra.mxu0 %v2695
          %2776 = vmatpush.bf16.msra.mxu0 %v2694
          %2777 = vmatpush.bf16.msra.mxu0 %v2693
          %2778 = vmatpush.bf16.msra.mxu0 %v2692
          %2779 = vmatmul.bf16.gmra.mxu0 %v2475
          %v2780 = vpop.f32.mrf.mxu0
          %v2781 = vadd.f32 %v2768, %v2780
          %v2782 = vpop.f32.mrf.mxu0
          %2783 = vdwg.mxu0
          %v2784 = vsel %vm1182, %v2781, 0.0
          %v2785 = vrot.slane %v2784, 4
          %v2786 = vadd.f32 %v2784, %v2785
          %v2787 = vrot.slane %v2786, 2
          %v2788 = vadd.f32 %v2786, %v2787
          %v2789 = vrot.slane %v2788, 1
          %v2790 = vadd.f32 %v2788, %v2789
          %v2791 = vmul.f32 %v2790, %v1217
          %v2792 = vsub.f32 %v2781, %v2791
          %v2793 = vmul.f32 %v2792, %v2792
          %v2794 = vsel %vm1182, %v2793, 0.0
          %v2795 = vrot.slane %v2794, 4
          %v2796 = vadd.f32 %v2794, %v2795
          %v2797 = vrot.slane %v2796, 2
          %v2798 = vadd.f32 %v2796, %v2797
          %v2799 = vrot.slane %v2798, 1
          %v2800 = vadd.f32 %v2798, %v2799
          %v2801 = vmul.f32 %v2800, %v1217
          %v2802 = vadd.f32 %v2801, 1e-05
          %v2803 = vrsqrt.pop %v2802
          %v2804 = vmul.f32 %v2803, %v2802
          %v2805 = vmul.f32 %v2804, %v2803
          %v2806 = vmul.f32 0.5, %v2805
          %v2807 = vsub.f32 1.5, %v2806
          %v2808 = vmul.f32 %v2803, %v2807
          %vm2809 = vweird.f32 %v2802
          %vm2810 = vweird.f32 %v2803
          %vm2811 = vmor %vm2809, %vm2810
          %v2812 = vsel %vm2811, %v2803, %v2808
          %v2813 = vmul.f32 %v2792, %v2812
          %2814 = vst [vmem:[#allocation6] sm:$0x3] %v2813
          %v2815 = vpack.c.bf16 %v2813, %v2813
          %v2816 = vld [vmem:[%s9] sm:$0xf]
          %v2817 = vld [vmem:[%s9 + $0x4] sm:$0xf]
          %v2818 = vld [vmem:[%s9 + $0x8] sm:$0xf]
          %v2819 = vld [vmem:[%s9 + $0xc] sm:$0xf]
          %v2820 = vld [vmem:[%s9 + $0x10] sm:$0xf]
          %v2821 = vld [vmem:[%s9 + $0x14] sm:$0xf]
          %v2822 = vld [vmem:[%s9 + $0x18] sm:$0xf]
          %v2823 = vld [vmem:[%s9 + $0x1c] sm:$0xf]
          %v2824 = vld [vmem:[%s9 + $0x20] sm:$0xf]
          %v2825 = vld [vmem:[%s9 + $0x24] sm:$0xf]
          %v2826 = vld [vmem:[%s9 + $0x28] sm:$0xf]
          %v2827 = vld [vmem:[%s9 + $0x2c] sm:$0xf]
          %v2828 = vld [vmem:[%s9 + $0x30] sm:$0xf]
          %v2829 = vld [vmem:[%s9 + $0x34] sm:$0xf]
          %v2830 = vld [vmem:[%s9 + $0x38] sm:$0xf]
          %v2831 = vld [vmem:[%s9 + $0x3c] sm:$0xf]
          %v2848 = vunpack.c.l.b16 %v2816
          %v2849 = vunpack.c.l.b16 %v2817
          %v2850 = vunpack.c.l.b16 %v2818
          %v2851 = vunpack.c.l.b16 %v2819
          %v2852 = vunpack.c.l.b16 %v2820
          %v2853 = vunpack.c.l.b16 %v2821
          %v2854 = vunpack.c.l.b16 %v2822
          %v2855 = vunpack.c.l.b16 %v2823
          %v2856 = vunpack.c.l.b16 %v2824
          %v2857 = vunpack.c.l.b16 %v2825
          %v2858 = vunpack.c.l.b16 %v2826
          %v2859 = vunpack.c.l.b16 %v2827
          %v2860 = vunpack.c.l.b16 %v2828
          %v2861 = vunpack.c.l.b16 %v2829
          %v2862 = vunpack.c.l.b16 %v2830
          %v2863 = vunpack.c.l.b16 %v2831
          %v2864 = vpack.c.b16 %v2849, %v2848
          %v2865 = vpack.c.b16 %v2851, %v2850
          %v2866 = vpack.c.b16 %v2853, %v2852
          %v2867 = vpack.c.b16 %v2855, %v2854
          %v2868 = vpack.c.b16 %v2857, %v2856
          %v2869 = vpack.c.b16 %v2859, %v2858
          %v2870 = vpack.c.b16 %v2861, %v2860
          %v2871 = vpack.c.b16 %v2863, %v2862
          %2880 = vmatpush.bf16.msra.mxu0 %v2871
          %2881 = vmatpush.bf16.msra.mxu0 %v2870
          %2882 = vmatpush.bf16.msra.mxu0 %v2869
          %2883 = vmatpush.bf16.msra.mxu0 %v2868
          %2884 = vmatpush.bf16.msra.mxu0 %v2867
          %2885 = vmatpush.bf16.msra.mxu0 %v2866
          %2886 = vmatpush.bf16.msra.mxu0 %v2865
          %2887 = vmatpush.bf16.msra.mxu0 %v2864
          %2888 = vmatmul.bf16.gmra.mxu0 %v2815
          %v2889 = vpop.f32.mrf.mxu0
          %v2890 = vadd.f32 0.0, %v2889
          %v2891 = vpop.f32.mrf.mxu0
          %2892 = vdwg.mxu0
          %v2893 = vld [vmem:[%s10] sm:$0x1]
          %v2894 = vld [vmem:[%s11] sm:$0x1]
          %v2895 = vsel %vm1182, %v2890, 0.0
          %v2896 = vrot.slane %v2895, 4
          %v2897 = vadd.f32 %v2895, %v2896
          %v2898 = vrot.slane %v2897, 2
          %v2899 = vadd.f32 %v2897, %v2898
          %v2900 = vrot.slane %v2899, 1
          %v2901 = vadd.f32 %v2899, %v2900
          %v2902 = vmul.f32 %v2901, %v1217
          %v2903 = vsub.f32 %v2890, %v2902
          %v2904 = vmul.f32 %v2903, %v2903
          %v2905 = vsel %vm1182, %v2904, 0.0
          %v2906 = vrot.slane %v2905, 4
          %v2907 = vadd.f32 %v2905, %v2906
          %v2908 = vrot.slane %v2907, 2
          %v2909 = vadd.f32 %v2907, %v2908
          %v2910 = vrot.slane %v2909, 1
          %v2911 = vadd.f32 %v2909, %v2910
          %v2912 = vmul.f32 %v2911, %v1217
          %v2913 = vadd.f32 %v2912, 1e-05
          %v2914 = vrsqrt.pop %v2913
          %v2915 = vmul.f32 %v2914, %v2913
          %v2916 = vmul.f32 %v2915, %v2914
          %v2917 = vmul.f32 0.5, %v2916
          %v2918 = vsub.f32 1.5, %v2917
          %v2919 = vmul.f32 %v2914, %v2918
          %vm2920 = vweird.f32 %v2913
          %vm2921 = vweird.f32 %v2914
          %vm2922 = vmor %vm2920, %vm2921
          %v2923 = vsel %vm2922, %v2914, %v2919
          %v2924 = vmul.f32 %v2903, %v2923
          %v2926 = vperm.slane %v2893, 0
          %v2928 = vmul.f32 %v2924, %v2926
          %v2930 = vperm.slane %v2894, 0
          %v2932 = vadd.f32 %v2928, %v2930
          %v2933 = vmax.f32 %v2932, 0.0
          %v2934 = vpack.c.bf16 %v2933, %v2933
          %v2935 = vld [vmem:[%s12] sm:$0xf]
          %v2936 = vld [vmem:[%s12 + $0x4] sm:$0xf]
          %v2937 = vld [vmem:[%s12 + $0x8] sm:$0xf]
          %v2938 = vld [vmem:[%s12 + $0xc] sm:$0xf]
          %v2939 = vld [vmem:[%s12 + $0x10] sm:$0xf]
          %v2940 = vld [vmem:[%s12 + $0x14] sm:$0xf]
          %v2941 = vld [vmem:[%s12 + $0x18] sm:$0xf]
          %v2942 = vld [vmem:[%s12 + $0x1c] sm:$0xf]
          %v2943 = vld [vmem:[%s12 + $0x20] sm:$0xf]
          %v2944 = vld [vmem:[%s12 + $0x24] sm:$0xf]
          %v2945 = vld [vmem:[%s12 + $0x28] sm:$0xf]
          %v2946 = vld [vmem:[%s12 + $0x2c] sm:$0xf]
          %v2947 = vld [vmem:[%s12 + $0x30] sm:$0xf]
          %v2948 = vld [vmem:[%s12 + $0x34] sm:$0xf]
          %v2949 = vld [vmem:[%s12 + $0x38] sm:$0xf]
          %v2950 = vld [vmem:[%s12 + $0x3c] sm:$0xf]
          %v2951 = vld [vmem:[%s13] sm:$0x1]
          %v2953 = vperm.slane %v2951, 0
          %v2971 = vunpack.c.l.b16 %v2935
          %v2972 = vunpack.c.l.b16 %v2936
          %v2973 = vunpack.c.l.b16 %v2937
          %v2974 = vunpack.c.l.b16 %v2938
          %v2975 = vunpack.c.l.b16 %v2939
          %v2976 = vunpack.c.l.b16 %v2940
          %v2977 = vunpack.c.l.b16 %v2941
          %v2978 = vunpack.c.l.b16 %v2942
          %v2979 = vunpack.c.l.b16 %v2943
          %v2980 = vunpack.c.l.b16 %v2944
          %v2981 = vunpack.c.l.b16 %v2945
          %v2982 = vunpack.c.l.b16 %v2946
          %v2983 = vunpack.c.l.b16 %v2947
          %v2984 = vunpack.c.l.b16 %v2948
          %v2985 = vunpack.c.l.b16 %v2949
          %v2986 = vunpack.c.l.b16 %v2950
          %v2987 = vpack.c.b16 %v2972, %v2971
          %v2988 = vpack.c.b16 %v2974, %v2973
          %v2989 = vpack.c.b16 %v2976, %v2975
          %v2990 = vpack.c.b16 %v2978, %v2977
          %v2991 = vpack.c.b16 %v2980, %v2979
          %v2992 = vpack.c.b16 %v2982, %v2981
          %v2993 = vpack.c.b16 %v2984, %v2983
          %v2994 = vpack.c.b16 %v2986, %v2985
          %3003 = vmatpush.bf16.msra.mxu0 %v2994
          %3004 = vmatpush.bf16.msra.mxu0 %v2993
          %3005 = vmatpush.bf16.msra.mxu0 %v2992
          %3006 = vmatpush.bf16.msra.mxu0 %v2991
          %3007 = vmatpush.bf16.msra.mxu0 %v2990
          %3008 = vmatpush.bf16.msra.mxu0 %v2989
          %3009 = vmatpush.bf16.msra.mxu0 %v2988
          %3010 = vmatpush.bf16.msra.mxu0 %v2987
          %3011 = vmatmul.bf16.gmra.mxu0 %v2934
          %v3012 = vpop.f32.mrf.mxu0
          %v3013 = vadd.f32 %v2953, %v3012
          %v3014 = vpop.f32.mrf.mxu0
          %3015 = vdwg.mxu0
          %3016 = vst [vmem:[#allocation8] sm:$0x3] %v3013
        $region118: #{simsiam_forward.1} parent=105 // pred_fallthru
          _
        // Predicated region
        $region119: #{simsiam_forward.1} parent=105 // pred_check
          %p3017 = pneg %p342
        $region120: #{simsiam_forward.1} parent=105 // pred_check_branch
          %3019 = sbr.rel (%p3017) target = $region122
        $region121: #{simsiam_forward.1} parent=105 // pred_region
          %3021 = vsyncadd [#allocation5], 0
          %s3023 = sshll.u32 [#allocation4], 4
          %s3024 = int_to_ptr.vmem [resolvable:$true] %s3023
          %s3025 = sshll.u32 %s14, 4
          %s3026 = int_to_ptr.hbm [resolvable:$true] %s3025
          %3028 = dma.vmem_to_hbm [thread:$0]  %s3024, 32, %s3026, [#allocation5]
        $region122: #{simsiam_forward.1} parent=105 // pred_fallthru
          _
        // Predicated region
        $region123: #{simsiam_forward.1} parent=105 // pred_check
          %p3029 = pneg %p363
        $region124: #{simsiam_forward.1} parent=105 // pred_check_branch
          %3031 = sbr.rel (%p3029) target = $region126
        $region125: #{simsiam_forward.1} parent=105 // pred_region
          %3033 = vsyncadd [#allocation7], 0
          %s3035 = sshll.u32 [#allocation6], 4
          %s3036 = int_to_ptr.vmem [resolvable:$true] %s3035
          %s3037 = sshll.u32 %s15, 4
          %s3038 = int_to_ptr.hbm [resolvable:$true] %s3037
          %3040 = dma.vmem_to_hbm [thread:$0]  %s3036, 32, %s3038, [#allocation7]
        $region126: #{simsiam_forward.1} parent=105 // pred_fallthru
          _
        // Predicated region
        $region127: #{simsiam_forward.1} parent=105 // pred_check
          %p3041 = pneg %p384
        $region128: #{simsiam_forward.1} parent=105 // pred_check_branch
          %3043 = sbr.rel (%p3041) target = $region130
        $region129: #{simsiam_forward.1} parent=105 // pred_region
          %3045 = vsyncadd [#allocation7], 0
          %s3047 = sshll.u32 [#allocation8], 4
          %s3048 = int_to_ptr.vmem [resolvable:$true] %s3047
          %s3049 = sshll.u32 %s16, 4
          %s3050 = int_to_ptr.hbm [resolvable:$true] %s3049
          %3052 = dma.vmem_to_hbm [thread:$0]  %s3048, 32, %s3050, [#allocation7]
        $region130: #{simsiam_forward.1} parent=105 // pred_fallthru
          _
        // Predicated region
        $region131: #{simsiam_forward.1} parent=105 // pred_check
          %p3053 = pneg %p342
        $region132: #{simsiam_forward.1} parent=105 // pred_check_branch
          %3055 = sbr.rel (%p3053) target = $region134
        $region133: #{simsiam_forward.1} parent=105 // pred_region
          %3057 = dma.done [#allocation5], 32
        $region134: #{simsiam_forward.1} parent=105 // pred_fallthru
          _
        // Predicated region
        $region135: #{simsiam_forward.1} parent=105 // pred_check
          %p3058 = pneg %p363
        $region136: #{simsiam_forward.1} parent=105 // pred_check_branch
          %3060 = sbr.rel (%p3058) target = $region138
        $region137: #{simsiam_forward.1} parent=105 // pred_region
          %3062 = dma.done [#allocation7], 32
        $region138: #{simsiam_forward.1} parent=105 // pred_fallthru
          _
        // Predicated region
        $region139: #{simsiam_forward.1} parent=105 // pred_check
          %p3063 = pneg %p384
        $region140: #{simsiam_forward.1} parent=105 // pred_check_branch
          %3065 = sbr.rel (%p3063) target = $region142
        $region141: #{simsiam_forward.1} parent=105 // pred_region
          %3067 = dma.done [#allocation7], 32
        $region142: #{simsiam_forward.1} parent=105 // pred_fallthru
          _
      $region106: #{simsiam_forward.1} parent=5 // pred_fallthru
        _
      %p3068 = scmp.le.s32.totalorder 2, %s25
      // Predicated region
      $region143: #{simsiam_forward.1} parent=5 // pred_check
        %p3069 = pneg %p3068
      $region144: #{simsiam_forward.1} parent=5 // pred_check_branch
        %3071 = sbr.rel (%p3069) target = $region146
      $region145: #{simsiam_forward.1} parent=5 // pred_region
        %s3072 = ssub.s32 %s25, 2
      $region146: #{simsiam_forward.1} parent=5 // pred_fallthru
        _
    $region6: #{simsiam_forward.1} parent=1 // loop_footer
      %s29 = sadd.s32 1, %s25
    $region7: #{simsiam_forward.1} parent=1 // loop_footer_branch
      %24 = sbr.rel target = $region3
    $region8: #{simsiam_forward.1} parent=1 // loop_exit
      _
    %3073 = vsyncpa [#allocation5], 1
    %s3074 = scalar_lea.sflag [#allocation5], 1
    %3075 = vsyncpa %s3074, 1
    %3076 = vsyncpa [#allocation7], 1

</llo_original>
